<compile_context>
chip_gen: v7x
topology: tpu7x:2x2x1
jax: 0.10.0
libtpu: 0.0.40
codegen_flags: <defaults>
</compile_context>

<pallas_src>
import functools
import math

import jax
import jax.numpy as jnp
from jax.experimental import pallas as pl
from jax.experimental.pallas import tpu as pltpu

LN_EPS = 1e-12  # HuggingFace BERT LayerNorm eps


# ----------------------------------------------------------------------------
# Helpers
# ----------------------------------------------------------------------------
def _vmem_limit():
    """Scoped VMEM cap: at most half the physical VMEM, hard-capped at 32 MiB.

    v5e/v6e (128 MiB) and v7x (64 MiB) all end up at 32 MiB, well above the
    ~6-10 MiB working set of the 512-wide tiles, with headroom on v7x.
    """
    cap = 128 * 1024 * 1024
    try:
        cap = int(getattr(pltpu.get_tpu_info(), "vmem_capacity_bytes", cap))
    except Exception:
        pass
    return int(min(32 * 1024 * 1024, cap // 2))


def _tile(dim, target, align):
    """Largest tile <= target that divides dim and stays a multiple of `align`;
    falls back to the full dim (always legal) if no such tile exists."""
    if dim <= target:
        return dim
    t = target
    while t >= align:
        if dim % t == 0:
            return t
        t //= 2
    return dim


def _as_bf16(x):
    return x if x.dtype == jnp.bfloat16 else x.astype(jnp.bfloat16)


def _apply_activation(y, activation):
    if activation == "relu":
        return jnp.maximum(y, 0.0)
    if activation == "tanh":
        return jnp.tanh(y)
    if activation == "gelu":
        # TODO(synk): HF BERT uses erf GELU; tanh approximation used for robust TPU lowering.
        return 0.5 * y * (1.0 + jnp.tanh(0.7978845608028654 * (y + 0.044715 * y * y * y)))
    return y


def _ln_core(x, g, b):
    mean = jnp.mean(x, axis=-1, keepdims=True)
    c = x - mean
    var = jnp.mean(c * c, axis=-1, keepdims=True)
    return c * jax.lax.rsqrt(var + LN_EPS) * g + b


# ----------------------------------------------------------------------------
# Linear: tiled matmul + bias + activation epilogue (bf16 in / bf16 out, f32 acc)
# ----------------------------------------------------------------------------
def _linear_kernel(x_ref, w_ref, b_ref, o_ref, acc_ref, *, activation):
    @pl.when(pl.program_id(2) == 0)
    def _init():
        acc_ref[...] = jnp.zeros_like(acc_ref)

    acc_ref[...] += jnp.dot(x_ref[...], w_ref[...], preferred_element_type=jnp.float32)

    @pl.when(pl.program_id(2) == pl.num_programs(2) - 1)
    def _finalize():
        y = acc_ref[...] + b_ref[...]
        o_ref[...] = _apply_activation(y, activation).astype(o_ref.dtype)


def linear(x, w, b, activation="none", out_dtype=jnp.bfloat16, tm=512, tn=512, tk=256):
    x = _as_bf16(x)
    w = _as_bf16(w)
    M, K = x.shape
    _, N = w.shape
    tm = _tile(M, tm, 8)
    tn = _tile(N, tn, 128)
    tk = _tile(K, tk, 128)
    grid = (M // tm, N // tn, K // tk)
    return pl.pallas_call(
        functools.partial(_linear_kernel, activation=activation),
        out_shape=jax.ShapeDtypeStruct((M, N), out_dtype),
        grid=grid,
        in_specs=[
            pl.BlockSpec((tm, tk), lambda i, j, k: (i, k)),
            pl.BlockSpec((tk, tn), lambda i, j, k: (k, j)),
            pl.BlockSpec((1, tn), lambda i, j, k: (0, j)),
        ],
        out_specs=pl.BlockSpec((tm, tn), lambda i, j, k: (i, j)),
        scratch_shapes=[pltpu.VMEM((tm, tn), jnp.float32)],
        compiler_params=pltpu.CompilerParams(
            dimension_semantics=("parallel", "parallel", "arbitrary"),
            vmem_limit_bytes=_vmem_limit(),
        ),
    )(x, w, b.reshape(1, N).astype(jnp.float32))


# ----------------------------------------------------------------------------
# Linear + residual-add + LayerNorm fused (finalize epilogue holds the full H row)
# ----------------------------------------------------------------------------
def _linear_add_ln_kernel(x_ref, w_ref, b_ref, r_ref, g_ref, be_ref, o_ref, acc_ref):
    @pl.when(pl.program_id(1) == 0)
    def _init():
        acc_ref[...] = jnp.zeros_like(acc_ref)

    acc_ref[...] += jnp.dot(x_ref[...], w_ref[...], preferred_element_type=jnp.float32)

    @pl.when(pl.program_id(1) == pl.num_programs(1) - 1)
    def _finalize():
        y = acc_ref[...] + b_ref[...] + r_ref[...].astype(jnp.float32)
        o_ref[...] = _ln_core(y, g_ref[...], be_ref[...]).astype(o_ref.dtype)


def linear_add_ln(x, w, b, residual, gamma, beta, out_dtype=jnp.bfloat16, tm=512, tk=256):
    """out = LayerNorm(x @ w + b + residual); full N=H output row resident per step."""
    x = _as_bf16(x)
    w = _as_bf16(w)
    residual = _as_bf16(residual)
    M, K = x.shape
    _, N = w.shape
    tm = _tile(M, tm, 8)
    tk = _tile(K, tk, 128)
    grid = (M // tm, K // tk)
    return pl.pallas_call(
        _linear_add_ln_kernel,
        out_shape=jax.ShapeDtypeStruct((M, N), out_dtype),
        grid=grid,
        in_specs=[
            pl.BlockSpec((tm, tk), lambda i, k: (i, k)),
            pl.BlockSpec((tk, N), lambda i, k: (k, 0)),
            pl.BlockSpec((1, N), lambda i, k: (0, 0)),
            pl.BlockSpec((tm, N), lambda i, k: (i, 0)),   # residual (fetched once per i)
            pl.BlockSpec((1, N), lambda i, k: (0, 0)),
            pl.BlockSpec((1, N), lambda i, k: (0, 0)),
        ],
        out_specs=pl.BlockSpec((tm, N), lambda i, k: (i, 0)),
        scratch_shapes=[pltpu.VMEM((tm, N), jnp.float32)],
        compiler_params=pltpu.CompilerParams(
            dimension_semantics=("parallel", "arbitrary"),
            vmem_limit_bytes=_vmem_limit(),
        ),
    )(x, w, b.reshape(1, N).astype(jnp.float32), residual,
      gamma.reshape(1, N).astype(jnp.float32), beta.reshape(1, N).astype(jnp.float32))


# ----------------------------------------------------------------------------
# Standalone LayerNorm (embeddings), row-tiled
# ----------------------------------------------------------------------------
def _ln_kernel(x_ref, g_ref, b_ref, o_ref):
    x = x_ref[...].astype(jnp.float32)
    o_ref[...] = _ln_core(x, g_ref[...], b_ref[...]).astype(o_ref.dtype)


def layernorm(x, gamma, beta, out_dtype=jnp.bfloat16, tm=512):
    M, H = x.shape
    tm = _tile(M, tm, 8)
    grid = (M // tm,)
    row_spec = pl.BlockSpec((tm, H), lambda i: (i, 0))
    vec_spec = pl.BlockSpec((1, H), lambda i: (0, 0))
    return pl.pallas_call(
        _ln_kernel,
        out_shape=jax.ShapeDtypeStruct((M, H), out_dtype),
        grid=grid,
        in_specs=[row_spec, vec_spec, vec_spec],
        out_specs=row_spec,
        compiler_params=pltpu.CompilerParams(
            dimension_semantics=("parallel",),
            vmem_limit_bytes=_vmem_limit(),
        ),
    )(x, gamma.reshape(1, H).astype(jnp.float32), beta.reshape(1, H).astype(jnp.float32))


# ----------------------------------------------------------------------------
# Multi-head self-attention
# ----------------------------------------------------------------------------
def _attn_heads(q, k, v, mask, num_heads, scale):
    """q/k/v: (S, num_heads*dh) bf16; mask: (1, S) additive f32 key mask."""
    S, W = q.shape
    dh = W // num_heads
    outs = []
    for h in range(num_heads):                       # static unroll over heads in this block
        lo = h * dh
        qh = q[:, lo:lo + dh] * scale                # scale folded into q (S x dh, not S x S)
        kh = k[:, lo:lo + dh]
        vh = v[:, lo:lo + dh]
        # q @ k^T without an explicit transpose: contract the head dim of both.
        s = jax.lax.dot_general(qh, kh, (((1,), (1,)), ((), ())),
                                preferred_element_type=jnp.float32)   # (S, S) f32
        s = s + mask
        s = s - jnp.max(s, axis=-1, keepdims=True)
        p = jnp.exp(s)
        p = p * pl.reciprocal(jnp.sum(p, axis=-1, keepdims=True), approx=True)
        outs.append(jnp.dot(p.astype(jnp.bfloat16), vh, preferred_element_type=jnp.float32))
    return jnp.concatenate(outs, axis=-1)            # (S, W)


def _attn_group_kernel(q_ref, k_ref, v_ref, m_ref, o_ref, *, heads, scale):
    mask = m_ref[0].astype(jnp.float32)              # (1, S)
    o_ref[0] = _attn_heads(q_ref[0], k_ref[0], v_ref[0], mask, heads, scale).astype(o_ref.dtype)


def _attn_fused_kernel(qkv_ref, m_ref, o_ref, *, heads, scale):
    H = o_ref.shape[2]
    qkv = qkv_ref[0]                                  # (S, 3H) bf16
    mask = m_ref[0].astype(jnp.float32)               # (1, S)
    ctx = _attn_heads(qkv[:, :H], qkv[:, H:2 * H], qkv[:, 2 * H:], mask, heads, scale)
    o_ref[0] = ctx.astype(o_ref.dtype)


def attention(qkv, ext_mask, num_heads, scale):
    """qkv: (B, S, 3H) bf16 (columns q | k | v); ext_mask: (B, 1, S) additive f32."""
    B, S, H3 = qkv.shape
    H = H3 // 3
    dh = H // num_heads

    # Smallest head group whose width is a multiple of 128 lanes (e.g. 2 heads for dh=64).
    hpg = None
    for g in range(1, num_heads + 1):
        if num_heads % g == 0 and (g * dh) % 128 == 0:
            hpg = g
            break

    if hpg is not None:
        gw = hpg * dh
        ng = H // gw                                   # head groups (and q/k/v block offset)
        kernel = functools.partial(_attn_group_kernel, heads=hpg, scale=scale)
        grid = (B, ng)
        in_specs = [
            pl.BlockSpec((1, S, gw), lambda b, g: (b, 0, g)),            # q slab
            pl.BlockSpec((1, S, gw), lambda b, g: (b, 0, ng + g)),       # k slab
            pl.BlockSpec((1, S, gw), lambda b, g: (b, 0, 2 * ng + g)),   # v slab
            pl.BlockSpec((1, 1, S), lambda b, g: (b, 0, 0)),
        ]
        out_specs = pl.BlockSpec((1, S, gw), lambda b, g: (b, 0, g))
        args = (qkv, qkv, qkv, ext_mask)
        dims = ("parallel", "parallel")
    else:
        # Head width too small to lane-align; keep whole (1, S, 3H) block per batch row.
        kernel = functools.partial(_attn_fused_kernel, heads=num_heads, scale=scale)
        grid = (B,)
        in_specs = [
            pl.BlockSpec((1, S, H3), lambda b: (b, 0, 0)),
            pl.BlockSpec((1, 1, S), lambda b: (b, 0, 0)),
        ]
        out_specs = pl.BlockSpec((1, S, H), lambda b: (b, 0, 0))
        args = (qkv, ext_mask)
        dims = ("parallel",)

    # TODO(synk): for S >> 1024 on v7x, additionally tile the query axis (flash-style).
    return pl.pallas_call(
        kernel,
        out_shape=jax.ShapeDtypeStruct((B, S, H), jnp.bfloat16),
        grid=grid,
        in_specs=in_specs,
        out_specs=out_specs,
        compiler_params=pltpu.CompilerParams(
            dimension_semantics=dims,
            vmem_limit_bytes=_vmem_limit(),
        ),
    )(*args)


# ----------------------------------------------------------------------------
# Fused pooler -> Linear -> ReLU -> Linear head (one pallas_call, weights resident)
# ----------------------------------------------------------------------------
def _head_kernel(cls_ref, pw_ref, pb_ref, w1_ref, b1_ref, w2_ref, b2_ref,
                 pooled_ref, proj_ref):
    cls = cls_ref[...]
    pooled = jnp.tanh(jnp.dot(cls, pw_ref[...], preferred_element_type=jnp.float32)
                      + pb_ref[...])
    pooled_ref[...] = pooled.astype(pooled_ref.dtype)
    h = jnp.maximum(jnp.dot(pooled.astype(jnp.bfloat16), w1_ref[...],
                            preferred_element_type=jnp.float32) + b1_ref[...], 0.0)
    proj = jnp.dot(h.astype(jnp.bfloat16), w2_ref[...],
                   preferred_element_type=jnp.float32) + b2_ref[...]
    proj_ref[...] = proj.astype(proj_ref.dtype)


def pooler_projection_head(cls, pw, pb, w1, b1, w2, b2):
    cls = _as_bf16(cls)
    B, H = cls.shape
    P = w2.shape[1]

    def full(shape):
        return pl.BlockSpec(shape, lambda i, _s=shape: (0,) * len(_s))

    return pl.pallas_call(
        _head_kernel,
        out_shape=(jax.ShapeDtypeStruct((B, H), jnp.float32),
                   jax.ShapeDtypeStruct((B, P), jnp.float32)),
        grid=(1,),
        in_specs=[full((B, H)),
                  full((H, H)), full((1, H)),
                  full((H, H)), full((1, H)),
                  full((H, P)), full((1, P))],
        out_specs=(full((B, H)), full((B, P))),
        compiler_params=pltpu.CompilerParams(vmem_limit_bytes=_vmem_limit()),
    )(cls, _as_bf16(pw), pb.reshape(1, H).astype(jnp.float32),
      _as_bf16(w1), b1.reshape(1, H).astype(jnp.float32),
      _as_bf16(w2), b2.reshape(1, P).astype(jnp.float32))


# ----------------------------------------------------------------------------
# Model (glue in JAX, compute in Pallas)
# ----------------------------------------------------------------------------
def encoder_layer(x, ext_mask, p, B, S, num_heads):
    H = x.shape[1]
    dh = H // num_heads

    # Fused QKV projection: one [H, 3H] matmul instead of three [H, H].
    qkv = linear(x, p["qkv_w"], p["qkv_b"]).reshape(B, S, 3 * H)          # bf16

    ctx = attention(qkv, ext_mask, num_heads, scale=1.0 / math.sqrt(dh))  # (B,S,H) bf16
    ctx = ctx.reshape(B * S, H)

    # attention output projection + residual + LayerNorm fused
    x = linear_add_ln(ctx, p["ao_w"], p["ao_b"], x, p["attn_ln_g"], p["attn_ln_b"])

    inter = linear(x, p["i_w"], p["i_b"], activation="gelu")
    # FFN down projection + residual + LayerNorm fused
    x = linear_add_ln(inter, p["o_w"], p["o_b"], x, p["out_ln_g"], p["out_ln_b"])
    return x


def bert_embedding_forward(params, input_ids, attention_mask, num_heads):
    B, S = input_ids.shape
    H = params["word_emb"].shape[1]

    # Embeddings (gathers stay in JAX glue) + LayerNorm kernel (-> bf16 residual stream).
    pos_ids = jnp.arange(S)
    emb = (params["word_emb"][input_ids]
           + params["pos_emb"][pos_ids][None, :, :]
           + params["type_emb"][0][None, None, :])  # TODO(synk): token_type_ids assumed all-zero
    x = layernorm(emb.reshape(B * S, H), params["emb_ln_g"], params["emb_ln_b"])

    # Extended additive attention mask: 0 where attended, large negative where masked (f32).
    ext_mask = ((1.0 - attention_mask.astype(jnp.float32)) * -1e9).reshape(B, 1, S)

    for layer_params in params["layers"]:
        x = encoder_layer(x, ext_mask, layer_params, B, S, num_heads)

    x = x.reshape(B, S, H)
    cls = x[:, 0, :]                                                       # (B, H) bf16

    # pooler (tanh) -> Linear -> ReLU -> Linear fused in one kernel
    pooled, projection = pooler_projection_head(
        cls, params["pooler_w"], params["pooler_b"],
        params["p1_w"], params["p1_b"], params["p2_w"], params["p2_b"])
    return pooled, projection


# ----------------------------------------------------------------------------
# Deterministic parameter init (random weights; from_pretrained is not reproducible here)
# ----------------------------------------------------------------------------
def init_params(key, vocab, max_pos, H, I, P, num_layers):
    keys = iter(jax.random.split(key, 8 + num_layers * 8))

    def w(shape, dtype=jnp.bfloat16):
        return (jax.random.normal(next(keys), shape, jnp.float32) * 0.02).astype(dtype)

    params = {
        "word_emb": w((vocab, H), jnp.float32),
        "pos_emb": w((max_pos, H), jnp.float32),
        "type_emb": w((2, H), jnp.float32),
        "emb_ln_g": jnp.ones((H,), jnp.float32),
        "emb_ln_b": jnp.zeros((H,), jnp.float32),
        "pooler_w": w((H, H)),
        "pooler_b": jnp.zeros((H,), jnp.float32),
        "p1_w": w((H, H)),
        "p1_b": jnp.zeros((H,), jnp.float32),
        "p2_w": w((H, P)),
        "p2_b": jnp.zeros((P,), jnp.float32),
        "layers": [],
    }
    for _ in range(num_layers):
        params["layers"].append({
            # fused QKV weight [H, 3H] (columns = q | k | v) and bias [3H]
            "qkv_w": w((H, 3 * H)),
            "qkv_b": jnp.zeros((3 * H,), jnp.float32),
            "ao_w": w((H, H)), "ao_b": jnp.zeros((H,), jnp.float32),
            "attn_ln_g": jnp.ones((H,), jnp.float32),
            "attn_ln_b": jnp.zeros((H,), jnp.float32),
            "i_w": w((H, I)), "i_b": jnp.zeros((I,), jnp.float32),
            "o_w": w((I, H)), "o_b": jnp.zeros((H,), jnp.float32),
            "out_ln_g": jnp.ones((H,), jnp.float32),
            "out_ln_b": jnp.zeros((H,), jnp.float32),
        })
    return params


if __name__ == "__main__":
    # Small shapes: batch=2, seq=8, hidden=32 (4 heads x 8), intermediate=64,
    # projection_dim=16, 2 encoder layers, vocab=100.
    B, S = 2, 8
    VOCAB, MAX_POS = 100, 16
    H, NH, I, P = 32, 4, 64, 16
    N_LAYERS = 2

    key = jax.random.PRNGKey(0)
    k_params, k_ids = jax.random.split(key)

    params = init_params(k_params, VOCAB, MAX_POS, H, I, P, N_LAYERS)
    input_ids = jax.random.randint(k_ids, (B, S), 0, VOCAB, dtype=jnp.int32)
    attention_mask = jnp.array([[1] * S, [1] * (S - 2) + [0] * 2], dtype=jnp.int32)

    fwd = jax.jit(bert_embedding_forward, static_argnums=(3,))
    pooled, projection = fwd(params, input_ids, attention_mask, NH)
    jax.block_until_ready((pooled, projection))

    assert pooled.shape == (B, H) and projection.shape == (B, P)
    assert bool(jnp.all(jnp.isfinite(pooled))) and bool(jnp.all(jnp.isfinite(projection)))
    print("KERNEL_OK")
</pallas_src>

<mosaic_0001>
module attributes {stable_mosaic.version = 11 : i64} {
  func.func @_ln_kernel(%arg0: i32, %arg1: memref<16x32xf32, #tpu.memory_space<vmem>>, %arg2: memref<1x32xf32, #tpu.memory_space<vmem>>, %arg3: memref<1x32xf32, #tpu.memory_space<vmem>>, %arg4: memref<16x32xbf16, #tpu.memory_space<vmem>>) attributes {dimension_semantics = [#tpu.dimension_semantics<parallel>], iteration_bounds = array<i64: 1>, scalar_prefetch = 0 : i64, scratch_operands = 0 : i64, tpu.core_type = #tpu.core_type<tc>, window_params = [{transform_indices = @transform_0, window_bounds = array<i64: 16, 32>}, {pipeline_mode = #tpu.pipeline_mode<synchronous>, transform_indices = @transform_1, window_bounds = array<i64: 1, 32>}, {pipeline_mode = #tpu.pipeline_mode<synchronous>, transform_indices = @transform_2, window_bounds = array<i64: 1, 32>}, {transform_indices = @transform_3, window_bounds = array<i64: 16, 32>}]} {
    %c0 = arith.constant 0 : index
    %c0_0 = arith.constant 0 : index
    %0 = vector.load %arg1[%c0, %c0_0] : memref<16x32xf32, #tpu.memory_space<vmem>>, vector<16x32xf32>
    %c0_1 = arith.constant 0 : index
    %c0_2 = arith.constant 0 : index
    %1 = vector.load %arg2[%c0_1, %c0_2] : memref<1x32xf32, #tpu.memory_space<vmem>>, vector<1x32xf32>
    %c0_3 = arith.constant 0 : index
    %c0_4 = arith.constant 0 : index
    %2 = vector.load %arg3[%c0_3, %c0_4] : memref<1x32xf32, #tpu.memory_space<vmem>>, vector<1x32xf32>
    %cst = arith.constant dense<0.000000e+00> : vector<16xf32>
    %3 = vector.multi_reduction <add>, %0, %cst [1] : vector<16x32xf32> to vector<16xf32>
    %4 = vector.shape_cast %3 : vector<16xf32> to vector<16x1xf32>
    %cst_5 = arith.constant 3.200000e+01 : f32
    %5 = vector.broadcast %cst_5 : f32 to vector<16x1xf32>
    %6 = arith.divf %4, %5 : vector<16x1xf32>
    %7 = vector.broadcast %6 : vector<16x1xf32> to vector<16x32xf32>
    %8 = arith.subf %0, %7 : vector<16x32xf32>
    %9 = arith.mulf %8, %8 : vector<16x32xf32>
    %cst_6 = arith.constant dense<0.000000e+00> : vector<16xf32>
    %10 = vector.multi_reduction <add>, %9, %cst_6 [1] : vector<16x32xf32> to vector<16xf32>
    %11 = vector.shape_cast %10 : vector<16xf32> to vector<16x1xf32>
    %cst_7 = arith.constant 3.200000e+01 : f32
    %12 = vector.broadcast %cst_7 : f32 to vector<16x1xf32>
    %13 = arith.divf %11, %12 : vector<16x1xf32>
    %cst_8 = arith.constant 9.99999996E-13 : f32
    %14 = vector.broadcast %cst_8 : f32 to vector<16x1xf32>
    %15 = arith.addf %13, %14 : vector<16x1xf32>
    %16 = math.rsqrt %15 : vector<16x1xf32>
    %17 = vector.broadcast %16 : vector<16x1xf32> to vector<16x32xf32>
    %18 = arith.mulf %8, %17 : vector<16x32xf32>
    %19 = vector.broadcast %1 : vector<1x32xf32> to vector<16x32xf32>
    %20 = arith.mulf %18, %19 : vector<16x32xf32>
    %21 = vector.broadcast %2 : vector<1x32xf32> to vector<16x32xf32>
    %22 = arith.addf %20, %21 : vector<16x32xf32>
    %23 = arith.truncf %22 : vector<16x32xf32> to vector<16x32xbf16>
    %c0_9 = arith.constant 0 : index
    %c0_10 = arith.constant 0 : index
    %24 = vector.load %arg4[%c0_9, %c0_10] : memref<16x32xbf16, #tpu.memory_space<vmem>>, vector<16x32xbf16>
    tpu.vector_store %arg4[%c0_9, %c0_10], %23 {strides = array<i32>} : memref<16x32xbf16, #tpu.memory_space<vmem>>, vector<16x32xbf16>,
    return
  }
  func.func @transform_0(%arg0: i32) -> (i32, i32) {
    %c0_i32 = arith.constant 0 : i32
    %c0_i32_0 = arith.constant 0 : i32
    return %arg0, %c0_i32 : i32, i32
  }
  func.func @transform_1(%arg0: i32) -> (i32, i32) {
    %c0_i32 = arith.constant 0 : i32
    %c0_i32_0 = arith.constant 0 : i32
    %c0_i32_1 = arith.constant 0 : i32
    return %c0_i32, %c0_i32_0 : i32, i32
  }
  func.func @transform_2(%arg0: i32) -> (i32, i32) {
    %c0_i32 = arith.constant 0 : i32
    %c0_i32_0 = arith.constant 0 : i32
    %c0_i32_1 = arith.constant 0 : i32
    return %c0_i32, %c0_i32_0 : i32, i32
  }
  func.func @transform_3(%arg0: i32) -> (i32, i32) {
    %c0_i32 = arith.constant 0 : i32
    %c0_i32_0 = arith.constant 0 : i32
    return %arg0, %c0_i32 : i32, i32
  }
}

module attributes {stable_mosaic.version = 11 : i64} {
  func.func @_linear_kernel(%arg0: i32, %arg1: i32, %arg2: i32, %arg3: memref<16x32xbf16, #tpu.memory_space<vmem>>, %arg4: memref<32x96xbf16, #tpu.memory_space<vmem>>, %arg5: memref<1x96xf32, #tpu.memory_space<vmem>>, %arg6: memref<16x96xbf16, #tpu.memory_space<vmem>>, %arg7: memref<16x96xf32, #tpu.memory_space<vmem>>) attributes {dimension_semantics = [#tpu.dimension_semantics<parallel>, #tpu.dimension_semantics<parallel>, #tpu.dimension_semantics<arbitrary>], iteration_bounds = array<i64: 1, 1, 1>, scalar_prefetch = 0 : i64, scratch_operands = 1 : i64, tpu.core_type = #tpu.core_type<tc>, window_params = [{transform_indices = @transform_0, window_bounds = array<i64: 16, 32>}, {transform_indices = @transform_1, window_bounds = array<i64: 32, 96>}, {transform_indices = @transform_2, window_bounds = array<i64: 1, 96>}, {transform_indices = @transform_3, window_bounds = array<i64: 16, 96>}]} {
    %c0_i32 = arith.constant 0 : i32
    %0 = arith.cmpi eq, %arg2, %c0_i32 : i32
    %1 = arith.extui %0 : i1 to i32
    %c0_i32_0 = arith.constant 0 : i32
    %2 = arith.cmpi ne, %1, %c0_i32_0 : i32
    scf.if %2 {
      %cst_10 = arith.constant 0.000000e+00 : f32
      %12 = vector.broadcast %cst_10 : f32 to vector<16x96xf32>
      %c0_11 = arith.constant 0 : index
      %c0_12 = arith.constant 0 : index
      %13 = vector.load %arg7[%c0_11, %c0_12] : memref<16x96xf32, #tpu.memory_space<vmem>>, vector<16x96xf32>
      tpu.vector_store %arg7[%c0_11, %c0_12], %12 {strides = array<i32>} : memref<16x96xf32, #tpu.memory_space<vmem>>, vector<16x96xf32>,
    } else {
    }
    %c0 = arith.constant 0 : index
    %c0_1 = arith.constant 0 : index
    %3 = vector.load %arg7[%c0, %c0_1] : memref<16x96xf32, #tpu.memory_space<vmem>>, vector<16x96xf32>
    %c0_2 = arith.constant 0 : index
    %c0_3 = arith.constant 0 : index
    %4 = vector.load %arg3[%c0_2, %c0_3] : memref<16x32xbf16, #tpu.memory_space<vmem>>, vector<16x32xbf16>
    %c0_4 = arith.constant 0 : index
    %c0_5 = arith.constant 0 : index
    %5 = vector.load %arg4[%c0_4, %c0_5] : memref<32x96xbf16, #tpu.memory_space<vmem>>, vector<32x96xbf16>
    %cst = arith.constant dense<0.000000e+00> : vector<16x96xf32>
    %6 = tpu.matmul %4, %5, %cst {dimension_numbers = #tpu.dot_dimension_numbers<[1], [0], [0], [1], [0, 0, 1, 1], [], []>} : vector<16x32xbf16>, vector<32x96xbf16>, vector<16x96xf32> -> vector<16x96xf32>
    %7 = arith.addf %3, %6 : vector<16x96xf32>
    %c0_6 = arith.constant 0 : index
    %c0_7 = arith.constant 0 : index
    %8 = vector.load %arg7[%c0_6, %c0_7] : memref<16x96xf32, #tpu.memory_space<vmem>>, vector<16x96xf32>
    tpu.vector_store %arg7[%c0_6, %c0_7], %7 {strides = array<i32>} : memref<16x96xf32, #tpu.memory_space<vmem>>, vector<16x96xf32>,
    %c0_i32_8 = arith.constant 0 : i32
    %9 = arith.cmpi eq, %arg2, %c0_i32_8 : i32
    %10 = arith.extui %9 : i1 to i32
    %c0_i32_9 = arith.constant 0 : i32
    %11 = arith.cmpi ne, %10, %c0_i32_9 : i32
    scf.if %11 {
      %c0_10 = arith.constant 0 : index
      %c0_11 = arith.constant 0 : index
      %12 = vector.load %arg7[%c0_10, %c0_11] : memref<16x96xf32, #tpu.memory_space<vmem>>, vector<16x96xf32>
      %c0_12 = arith.constant 0 : index
      %c0_13 = arith.constant 0 : index
      %13 = vector.load %arg5[%c0_12, %c0_13] : memref<1x96xf32, #tpu.memory_space<vmem>>, vector<1x96xf32>
      %14 = vector.broadcast %13 : vector<1x96xf32> to vector<16x96xf32>
      %15 = arith.addf %12, %14 : vector<16x96xf32>
      %16 = arith.truncf %15 : vector<16x96xf32> to vector<16x96xbf16>
      %c0_14 = arith.constant 0 : index
      %c0_15 = arith.constant 0 : index
      %17 = vector.load %arg6[%c0_14, %c0_15] : memref<16x96xbf16, #tpu.memory_space<vmem>>, vector<16x96xbf16>
      tpu.vector_store %arg6[%c0_14, %c0_15], %16 {strides = array<i32>} : memref<16x96xbf16, #tpu.memory_space<vmem>>, vector<16x96xbf16>,
    } else {
    }
    return
  }
  func.func @transform_0(%arg0: i32, %arg1: i32, %arg2: i32) -> (i32, i32) {
    %c0_i32 = arith.constant 0 : i32
    return %arg0, %arg2 : i32, i32
  }
  func.func @transform_1(%arg0: i32, %arg1: i32, %arg2: i32) -> (i32, i32) {
    %c0_i32 = arith.constant 0 : i32
    return %arg2, %arg1 : i32, i32
  }
  func.func @transform_2(%arg0: i32, %arg1: i32, %arg2: i32) -> (i32, i32) {
    %c0_i32 = arith.constant 0 : i32
    %c0_i32_0 = arith.constant 0 : i32
    return %c0_i32, %arg1 : i32, i32
  }
  func.func @transform_3(%arg0: i32, %arg1: i32, %arg2: i32) -> (i32, i32) {
    %c0_i32 = arith.constant 0 : i32
    return %arg0, %arg1 : i32, i32
  }
}

module attributes {stable_mosaic.version = 11 : i64} {
  func.func @_linear_add_ln_kernel(%arg0: i32, %arg1: i32, %arg2: memref<16x32xbf16, #tpu.memory_space<vmem>>, %arg3: memref<32x32xbf16, #tpu.memory_space<vmem>>, %arg4: memref<1x32xf32, #tpu.memory_space<vmem>>, %arg5: memref<16x32xbf16, #tpu.memory_space<vmem>>, %arg6: memref<1x32xf32, #tpu.memory_space<vmem>>, %arg7: memref<1x32xf32, #tpu.memory_space<vmem>>, %arg8: memref<16x32xbf16, #tpu.memory_space<vmem>>, %arg9: memref<16x32xf32, #tpu.memory_space<vmem>>) attributes {dimension_semantics = [#tpu.dimension_semantics<parallel>, #tpu.dimension_semantics<arbitrary>], iteration_bounds = array<i64: 1, 1>, scalar_prefetch = 0 : i64, scratch_operands = 1 : i64, tpu.core_type = #tpu.core_type<tc>, window_params = [{transform_indices = @transform_0, window_bounds = array<i64: 16, 32>}, {transform_indices = @transform_1, window_bounds = array<i64: 32, 32>}, {pipeline_mode = #tpu.pipeline_mode<synchronous>, transform_indices = @transform_2, window_bounds = array<i64: 1, 32>}, {transform_indices = @transform_3, window_bounds = array<i64: 16, 32>}, {pipeline_mode = #tpu.pipeline_mode<synchronous>, transform_indices = @transform_4, window_bounds = array<i64: 1, 32>}, {pipeline_mode = #tpu.pipeline_mode<synchronous>, transform_indices = @transform_5, window_bounds = array<i64: 1, 32>}, {transform_indices = @transform_6, window_bounds = array<i64: 16, 32>}]} {
    %c0_i32 = arith.constant 0 : i32
    %0 = arith.cmpi eq, %arg1, %c0_i32 : i32
    %1 = arith.extui %0 : i1 to i32
    %c0_i32_0 = arith.constant 0 : i32
    %2 = arith.cmpi ne, %1, %c0_i32_0 : i32
    scf.if %2 {
      %cst_10 = arith.constant 0.000000e+00 : f32
      %12 = vector.broadcast %cst_10 : f32 to vector<16x32xf32>
      %c0_11 = arith.constant 0 : index
      %c0_12 = arith.constant 0 : index
      %13 = vector.load %arg9[%c0_11, %c0_12] : memref<16x32xf32, #tpu.memory_space<vmem>>, vector<16x32xf32>
      tpu.vector_store %arg9[%c0_11, %c0_12], %12 {strides = array<i32>} : memref<16x32xf32, #tpu.memory_space<vmem>>, vector<16x32xf32>,
    } else {
    }
    %c0 = arith.constant 0 : index
    %c0_1 = arith.constant 0 : index
    %3 = vector.load %arg9[%c0, %c0_1] : memref<16x32xf32, #tpu.memory_space<vmem>>, vector<16x32xf32>
    %c0_2 = arith.constant 0 : index
    %c0_3 = arith.constant 0 : index
    %4 = vector.load %arg2[%c0_2, %c0_3] : memref<16x32xbf16, #tpu.memory_space<vmem>>, vector<16x32xbf16>
    %c0_4 = arith.constant 0 : index
    %c0_5 = arith.constant 0 : index
    %5 = vector.load %arg3[%c0_4, %c0_5] : memref<32x32xbf16, #tpu.memory_space<vmem>>, vector<32x32xbf16>
    %cst = arith.constant dense<0.000000e+00> : vector<16x32xf32>
    %6 = tpu.matmul %4, %5, %cst {dimension_numbers = #tpu.dot_dimension_numbers<[1], [0], [0], [1], [0, 0, 1, 1], [], []>} : vector<16x32xbf16>, vector<32x32xbf16>, vector<16x32xf32> -> vector<16x32xf32>
    %7 = arith.addf %3, %6 : vector<16x32xf32>
    %c0_6 = arith.constant 0 : index
    %c0_7 = arith.constant 0 : index
    %8 = vector.load %arg9[%c0_6, %c0_7] : memref<16x32xf32, #tpu.memory_space<vmem>>, vector<16x32xf32>
    tpu.vector_store %arg9[%c0_6, %c0_7], %7 {strides = array<i32>} : memref<16x32xf32, #tpu.memory_space<vmem>>, vector<16x32xf32>,
    %c0_i32_8 = arith.constant 0 : i32
    %9 = arith.cmpi eq, %arg1, %c0_i32_8 : i32
    %10 = arith.extui %9 : i1 to i32
    %c0_i32_9 = arith.constant 0 : i32
    %11 = arith.cmpi ne, %10, %c0_i32_9 : i32
    scf.if %11 {
      %c0_10 = arith.constant 0 : index
      %c0_11 = arith.constant 0 : index
      %12 = vector.load %arg9[%c0_10, %c0_11] : memref<16x32xf32, #tpu.memory_space<vmem>>, vector<16x32xf32>
      %c0_12 = arith.constant 0 : index
      %c0_13 = arith.constant 0 : index
      %13 = vector.load %arg4[%c0_12, %c0_13] : memref<1x32xf32, #tpu.memory_space<vmem>>, vector<1x32xf32>
      %14 = vector.broadcast %13 : vector<1x32xf32> to vector<16x32xf32>
      %15 = arith.addf %12, %14 : vector<16x32xf32>
      %c0_14 = arith.constant 0 : index
      %c0_15 = arith.constant 0 : index
      %16 = vector.load %arg5[%c0_14, %c0_15] : memref<16x32xbf16, #tpu.memory_space<vmem>>, vector<16x32xbf16>
      %17 = arith.extf %16 : vector<16x32xbf16> to vector<16x32xf32>
      %18 = arith.addf %15, %17 : vector<16x32xf32>
      %c0_16 = arith.constant 0 : index
      %c0_17 = arith.constant 0 : index
      %19 = vector.load %arg6[%c0_16, %c0_17] : memref<1x32xf32, #tpu.memory_space<vmem>>, vector<1x32xf32>
      %c0_18 = arith.constant 0 : index
      %c0_19 = arith.constant 0 : index
      %20 = vector.load %arg7[%c0_18, %c0_19] : memref<1x32xf32, #tpu.memory_space<vmem>>, vector<1x32xf32>
      %cst_20 = arith.constant dense<0.000000e+00> : vector<16xf32>
      %21 = vector.multi_reduction <add>, %18, %cst_20 [1] : vector<16x32xf32> to vector<16xf32>
      %22 = vector.shape_cast %21 : vector<16xf32> to vector<16x1xf32>
      %cst_21 = arith.constant 3.200000e+01 : f32
      %23 = vector.broadcast %cst_21 : f32 to vector<16x1xf32>
      %24 = arith.divf %22, %23 : vector<16x1xf32>
      %25 = vector.broadcast %24 : vector<16x1xf32> to vector<16x32xf32>
      %26 = arith.subf %18, %25 : vector<16x32xf32>
      %27 = arith.mulf %26, %26 : vector<16x32xf32>
      %cst_22 = arith.constant dense<0.000000e+00> : vector<16xf32>
      %28 = vector.multi_reduction <add>, %27, %cst_22 [1] : vector<16x32xf32> to vector<16xf32>
      %29 = vector.shape_cast %28 : vector<16xf32> to vector<16x1xf32>
      %cst_23 = arith.constant 3.200000e+01 : f32
      %30 = vector.broadcast %cst_23 : f32 to vector<16x1xf32>
      %31 = arith.divf %29, %30 : vector<16x1xf32>
      %cst_24 = arith.constant 9.99999996E-13 : f32
      %32 = vector.broadcast %cst_24 : f32 to vector<16x1xf32>
      %33 = arith.addf %31, %32 : vector<16x1xf32>
      %34 = math.rsqrt %33 : vector<16x1xf32>
      %35 = vector.broadcast %34 : vector<16x1xf32> to vector<16x32xf32>
      %36 = arith.mulf %26, %35 : vector<16x32xf32>
      %37 = vector.broadcast %19 : vector<1x32xf32> to vector<16x32xf32>
      %38 = arith.mulf %36, %37 : vector<16x32xf32>
      %39 = vector.broadcast %20 : vector<1x32xf32> to vector<16x32xf32>
      %40 = arith.addf %38, %39 : vector<16x32xf32>
      %41 = arith.truncf %40 : vector<16x32xf32> to vector<16x32xbf16>
      %c0_25 = arith.constant 0 : index
      %c0_26 = arith.constant 0 : index
      %42 = vector.load %arg8[%c0_25, %c0_26] : memref<16x32xbf16, #tpu.memory_space<vmem>>, vector<16x32xbf16>
      tpu.vector_store %arg8[%c0_25, %c0_26], %41 {strides = array<i32>} : memref<16x32xbf16, #tpu.memory_space<vmem>>, vector<16x32xbf16>,
    } else {
    }
    return
  }
  func.func @transform_0(%arg0: i32, %arg1: i32) -> (i32, i32) {
    %c0_i32 = arith.constant 0 : i32
    return %arg0, %arg1 : i32, i32
  }
  func.func @transform_1(%arg0: i32, %arg1: i32) -> (i32, i32) {
    %c0_i32 = arith.constant 0 : i32
    %c0_i32_0 = arith.constant 0 : i32
    return %arg1, %c0_i32 : i32, i32
  }
  func.func @transform_2(%arg0: i32, %arg1: i32) -> (i32, i32) {
    %c0_i32 = arith.constant 0 : i32
    %c0_i32_0 = arith.constant 0 : i32
    %c0_i32_1 = arith.constant 0 : i32
    return %c0_i32, %c0_i32_0 : i32, i32
  }
  func.func @transform_3(%arg0: i32, %arg1: i32) -> (i32, i32) {
    %c0_i32 = arith.constant 0 : i32
    %c0_i32_0 = arith.constant 0 : i32
    return %arg0, %c0_i32 : i32, i32
  }
  func.func @transform_4(%arg0: i32, %arg1: i32) -> (i32, i32) {
    %c0_i32 = arith.constant 0 : i32
    %c0_i32_0 = arith.constant 0 : i32
    %c0_i32_1 = arith.constant 0 : i32
    return %c0_i32, %c0_i32_0 : i32, i32
  }
  func.func @transform_5(%arg0: i32, %arg1: i32) -> (i32, i32) {
    %c0_i32 = arith.constant 0 : i32
    %c0_i32_0 = arith.constant 0 : i32
    %c0_i32_1 = arith.constant 0 : i32
    return %c0_i32, %c0_i32_0 : i32, i32
  }
  func.func @transform_6(%arg0: i32, %arg1: i32) -> (i32, i32) {
    %c0_i32 = arith.constant 0 : i32
    %c0_i32_0 = arith.constant 0 : i32
    return %arg0, %c0_i32 : i32, i32
  }
}

module attributes {stable_mosaic.version = 11 : i64} {
  func.func @_attn_fused_kernel(%arg0: i32, %arg1: memref<1x8x96xbf16, #tpu.memory_space<vmem>>, %arg2: memref<1x1x8xf32, #tpu.memory_space<vmem>>, %arg3: memref<1x8x32xbf16, #tpu.memory_space<vmem>>) attributes {dimension_semantics = [#tpu.dimension_semantics<parallel>], iteration_bounds = array<i64: 2>, scalar_prefetch = 0 : i64, scratch_operands = 0 : i64, tpu.core_type = #tpu.core_type<tc>, window_params = [{transform_indices = @transform_0, window_bounds = array<i64: 1, 8, 96>}, {transform_indices = @transform_1, window_bounds = array<i64: 1, 1, 8>}, {transform_indices = @transform_2, window_bounds = array<i64: 1, 8, 32>}]} {
    %c0 = arith.constant 0 : index
    %c0_0 = arith.constant 0 : index
    %c0_1 = arith.constant 0 : index
    %0 = vector.load %arg1[%c0, %c0_0, %c0_1] : memref<1x8x96xbf16, #tpu.memory_space<vmem>>, vector<1x8x96xbf16>
    %1 = vector.shape_cast %0 : vector<1x8x96xbf16> to vector<8x96xbf16>
    %c0_2 = arith.constant 0 : index
    %c0_3 = arith.constant 0 : index
    %c0_4 = arith.constant 0 : index
    %2 = vector.load %arg2[%c0_2, %c0_3, %c0_4] : memref<1x1x8xf32, #tpu.memory_space<vmem>>, vector<1x1x8xf32>
    %3 = vector.shape_cast %2 : vector<1x1x8xf32> to vector<1x8xf32>
    %4 = vector.extract_strided_slice %1 {offsets = [0, 0], sizes = [8, 32], strides = [1, 1]} : vector<8x96xbf16> to vector<8x32xbf16>
    %5 = vector.extract_strided_slice %1 {offsets = [0, 32], sizes = [8, 32], strides = [1, 1]} : vector<8x96xbf16> to vector<8x32xbf16>
    %6 = vector.extract_strided_slice %1 {offsets = [0, 64], sizes = [8, 32], strides = [1, 1]} : vector<8x96xbf16> to vector<8x32xbf16>
    %7 = vector.extract_strided_slice %4 {offsets = [0, 0], sizes = [8, 8], strides = [1, 1]} : vector<8x32xbf16> to vector<8x8xbf16>
    %cst = arith.constant 3.535160e-01 : bf16
    %8 = vector.broadcast %cst : bf16 to vector<8x8xbf16>
    %9 = arith.mulf %7, %8 : vector<8x8xbf16>
    %10 = vector.extract_strided_slice %5 {offsets = [0, 0], sizes = [8, 8], strides = [1, 1]} : vector<8x32xbf16> to vector<8x8xbf16>
    %11 = vector.extract_strided_slice %6 {offsets = [0, 0], sizes = [8, 8], strides = [1, 1]} : vector<8x32xbf16> to vector<8x8xbf16>
    %cst_5 = arith.constant dense<0.000000e+00> : vector<8x8xf32>
    %12 = tpu.matmul %9, %10, %cst_5 {dimension_numbers = #tpu.dot_dimension_numbers<[1], [1], [0], [0], [0, 0, 1, 0], [], []>} : vector<8x8xbf16>, vector<8x8xbf16>, vector<8x8xf32> -> vector<8x8xf32>
    %13 = vector.broadcast %3 : vector<1x8xf32> to vector<8x8xf32>
    %14 = arith.addf %12, %13 : vector<8x8xf32>
    %cst_6 = arith.constant dense<0xFF800000> : vector<8xf32>
    %15 = vector.multi_reduction <maximumf>, %14, %cst_6 [1] : vector<8x8xf32> to vector<8xf32>
    %16 = vector.shape_cast %15 : vector<8xf32> to vector<8x1xf32>
    %17 = vector.broadcast %16 : vector<8x1xf32> to vector<8x8xf32>
    %18 = arith.subf %14, %17 : vector<8x8xf32>
    %19 = math.exp %18 : vector<8x8xf32>
    %cst_7 = arith.constant dense<0.000000e+00> : vector<8xf32>
    %20 = vector.multi_reduction <add>, %19, %cst_7 [1] : vector<8x8xf32> to vector<8xf32>
    %21 = vector.shape_cast %20 : vector<8xf32> to vector<8x1xf32>
    %22 = tpu.reciprocal %21 {approx = true} : vector<8x1xf32> -> vector<8x1xf32>
    %23 = vector.broadcast %22 : vector<8x1xf32> to vector<8x8xf32>
    %24 = arith.mulf %19, %23 : vector<8x8xf32>
    %25 = arith.truncf %24 : vector<8x8xf32> to vector<8x8xbf16>
    %cst_8 = arith.constant dense<0.000000e+00> : vector<8x8xf32>
    %26 = tpu.matmul %25, %11, %cst_8 {dimension_numbers = #tpu.dot_dimension_numbers<[1], [0], [0], [1], [0, 0, 1, 1], [], []>} : vector<8x8xbf16>, vector<8x8xbf16>, vector<8x8xf32> -> vector<8x8xf32>
    %27 = vector.extract_strided_slice %4 {offsets = [0, 8], sizes = [8, 8], strides = [1, 1]} : vector<8x32xbf16> to vector<8x8xbf16>
    %cst_9 = arith.constant 3.535160e-01 : bf16
    %28 = vector.broadcast %cst_9 : bf16 to vector<8x8xbf16>
    %29 = arith.mulf %27, %28 : vector<8x8xbf16>
    %30 = vector.extract_strided_slice %5 {offsets = [0, 8], sizes = [8, 8], strides = [1, 1]} : vector<8x32xbf16> to vector<8x8xbf16>
    %31 = vector.extract_strided_slice %6 {offsets = [0, 8], sizes = [8, 8], strides = [1, 1]} : vector<8x32xbf16> to vector<8x8xbf16>
    %cst_10 = arith.constant dense<0.000000e+00> : vector<8x8xf32>
    %32 = tpu.matmul %29, %30, %cst_10 {dimension_numbers = #tpu.dot_dimension_numbers<[1], [1], [0], [0], [0, 0, 1, 0], [], []>} : vector<8x8xbf16>, vector<8x8xbf16>, vector<8x8xf32> -> vector<8x8xf32>
    %33 = vector.broadcast %3 : vector<1x8xf32> to vector<8x8xf32>
    %34 = arith.addf %32, %33 : vector<8x8xf32>
    %cst_11 = arith.constant dense<0xFF800000> : vector<8xf32>
    %35 = vector.multi_reduction <maximumf>, %34, %cst_11 [1] : vector<8x8xf32> to vector<8xf32>
    %36 = vector.shape_cast %35 : vector<8xf32> to vector<8x1xf32>
    %37 = vector.broadcast %36 : vector<8x1xf32> to vector<8x8xf32>
    %38 = arith.subf %34, %37 : vector<8x8xf32>
    %39 = math.exp %38 : vector<8x8xf32>
    %cst_12 = arith.constant dense<0.000000e+00> : vector<8xf32>
    %40 = vector.multi_reduction <add>, %39, %cst_12 [1] : vector<8x8xf32> to vector<8xf32>
    %41 = vector.shape_cast %40 : vector<8xf32> to vector<8x1xf32>
    %42 = tpu.reciprocal %41 {approx = true} : vector<8x1xf32> -> vector<8x1xf32>
    %43 = vector.broadcast %42 : vector<8x1xf32> to vector<8x8xf32>
    %44 = arith.mulf %39, %43 : vector<8x8xf32>
    %45 = arith.truncf %44 : vector<8x8xf32> to vector<8x8xbf16>
    %cst_13 = arith.constant dense<0.000000e+00> : vector<8x8xf32>
    %46 = tpu.matmul %45, %31, %cst_13 {dimension_numbers = #tpu.dot_dimension_numbers<[1], [0], [0], [1], [0, 0, 1, 1], [], []>} : vector<8x8xbf16>, vector<8x8xbf16>, vector<8x8xf32> -> vector<8x8xf32>
    %47 = vector.extract_strided_slice %4 {offsets = [0, 16], sizes = [8, 8], strides = [1, 1]} : vector<8x32xbf16> to vector<8x8xbf16>
    %cst_14 = arith.constant 3.535160e-01 : bf16
    %48 = vector.broadcast %cst_14 : bf16 to vector<8x8xbf16>
    %49 = arith.mulf %47, %48 : vector<8x8xbf16>
    %50 = vector.extract_strided_slice %5 {offsets = [0, 16], sizes = [8, 8], strides = [1, 1]} : vector<8x32xbf16> to vector<8x8xbf16>
    %51 = vector.extract_strided_slice %6 {offsets = [0, 16], sizes = [8, 8], strides = [1, 1]} : vector<8x32xbf16> to vector<8x8xbf16>
    %cst_15 = arith.constant dense<0.000000e+00> : vector<8x8xf32>
    %52 = tpu.matmul %49, %50, %cst_15 {dimension_numbers = #tpu.dot_dimension_numbers<[1], [1], [0], [0], [0, 0, 1, 0], [], []>} : vector<8x8xbf16>, vector<8x8xbf16>, vector<8x8xf32> -> vector<8x8xf32>
    %53 = vector.broadcast %3 : vector<1x8xf32> to vector<8x8xf32>
    %54 = arith.addf %52, %53 : vector<8x8xf32>
    %cst_16 = arith.constant dense<0xFF800000> : vector<8xf32>
    %55 = vector.multi_reduction <maximumf>, %54, %cst_16 [1] : vector<8x8xf32> to vector<8xf32>
    %56 = vector.shape_cast %55 : vector<8xf32> to vector<8x1xf32>
    %57 = vector.broadcast %56 : vector<8x1xf32> to vector<8x8xf32>
    %58 = arith.subf %54, %57 : vector<8x8xf32>
    %59 = math.exp %58 : vector<8x8xf32>
    %cst_17 = arith.constant dense<0.000000e+00> : vector<8xf32>
    %60 = vector.multi_reduction <add>, %59, %cst_17 [1] : vector<8x8xf32> to vector<8xf32>
    %61 = vector.shape_cast %60 : vector<8xf32> to vector<8x1xf32>
    %62 = tpu.reciprocal %61 {approx = true} : vector<8x1xf32> -> vector<8x1xf32>
    %63 = vector.broadcast %62 : vector<8x1xf32> to vector<8x8xf32>
    %64 = arith.mulf %59, %63 : vector<8x8xf32>
    %65 = arith.truncf %64 : vector<8x8xf32> to vector<8x8xbf16>
    %cst_18 = arith.constant dense<0.000000e+00> : vector<8x8xf32>
    %66 = tpu.matmul %65, %51, %cst_18 {dimension_numbers = #tpu.dot_dimension_numbers<[1], [0], [0], [1], [0, 0, 1, 1], [], []>} : vector<8x8xbf16>, vector<8x8xbf16>, vector<8x8xf32> -> vector<8x8xf32>
    %67 = vector.extract_strided_slice %4 {offsets = [0, 24], sizes = [8, 8], strides = [1, 1]} : vector<8x32xbf16> to vector<8x8xbf16>
    %cst_19 = arith.constant 3.535160e-01 : bf16
    %68 = vector.broadcast %cst_19 : bf16 to vector<8x8xbf16>
    %69 = arith.mulf %67, %68 : vector<8x8xbf16>
    %70 = vector.extract_strided_slice %5 {offsets = [0, 24], sizes = [8, 8], strides = [1, 1]} : vector<8x32xbf16> to vector<8x8xbf16>
    %71 = vector.extract_strided_slice %6 {offsets = [0, 24], sizes = [8, 8], strides = [1, 1]} : vector<8x32xbf16> to vector<8x8xbf16>
    %cst_20 = arith.constant dense<0.000000e+00> : vector<8x8xf32>
    %72 = tpu.matmul %69, %70, %cst_20 {dimension_numbers = #tpu.dot_dimension_numbers<[1], [1], [0], [0], [0, 0, 1, 0], [], []>} : vector<8x8xbf16>, vector<8x8xbf16>, vector<8x8xf32> -> vector<8x8xf32>
    %73 = vector.broadcast %3 : vector<1x8xf32> to vector<8x8xf32>
    %74 = arith.addf %72, %73 : vector<8x8xf32>
    %cst_21 = arith.constant dense<0xFF800000> : vector<8xf32>
    %75 = vector.multi_reduction <maximumf>, %74, %cst_21 [1] : vector<8x8xf32> to vector<8xf32>
    %76 = vector.shape_cast %75 : vector<8xf32> to vector<8x1xf32>
    %77 = vector.broadcast %76 : vector<8x1xf32> to vector<8x8xf32>
    %78 = arith.subf %74, %77 : vector<8x8xf32>
    %79 = math.exp %78 : vector<8x8xf32>
    %cst_22 = arith.constant dense<0.000000e+00> : vector<8xf32>
    %80 = vector.multi_reduction <add>, %79, %cst_22 [1] : vector<8x8xf32> to vector<8xf32>
    %81 = vector.shape_cast %80 : vector<8xf32> to vector<8x1xf32>
    %82 = tpu.reciprocal %81 {approx = true} : vector<8x1xf32> -> vector<8x1xf32>
    %83 = vector.broadcast %82 : vector<8x1xf32> to vector<8x8xf32>
    %84 = arith.mulf %79, %83 : vector<8x8xf32>
    %85 = arith.truncf %84 : vector<8x8xf32> to vector<8x8xbf16>
    %cst_23 = arith.constant dense<0.000000e+00> : vector<8x8xf32>
    %86 = tpu.matmul %85, %71, %cst_23 {dimension_numbers = #tpu.dot_dimension_numbers<[1], [0], [0], [1], [0, 0, 1, 1], [], []>} : vector<8x8xbf16>, vector<8x8xbf16>, vector<8x8xf32> -> vector<8x8xf32>
    %87 = tpu.concatenate %26, %46, %66, %86 in 1 : vector<8x8xf32>, vector<8x8xf32>, vector<8x8xf32>, vector<8x8xf32> -> vector<8x32xf32>
    %88 = arith.truncf %87 : vector<8x32xf32> to vector<8x32xbf16>
    %c0_24 = arith.constant 0 : index
    %c0_25 = arith.constant 0 : index
    %c0_26 = arith.constant 0 : index
    %89 = vector.load %arg3[%c0_24, %c0_25, %c0_26] : memref<1x8x32xbf16, #tpu.memory_space<vmem>>, vector<1x8x32xbf16>
    %90 = vector.shape_cast %89 : vector<1x8x32xbf16> to vector<8x32xbf16>
    %91 = vector.shape_cast %88 : vector<8x32xbf16> to vector<1x8x32xbf16>
    tpu.vector_store %arg3[%c0_24, %c0_25, %c0_26], %91 {strides = array<i32>} : memref<1x8x32xbf16, #tpu.memory_space<vmem>>, vector<1x8x32xbf16>,
    return
  }
  func.func @transform_0(%arg0: i32) -> (i32, i32, i32) {
    %c0_i32 = arith.constant 0 : i32
    %c0_i32_0 = arith.constant 0 : i32
    %c0_i32_1 = arith.constant 0 : i32
    return %arg0, %c0_i32, %c0_i32_0 : i32, i32, i32
  }
  func.func @transform_1(%arg0: i32) -> (i32, i32, i32) {
    %c0_i32 = arith.constant 0 : i32
    %c0_i32_0 = arith.constant 0 : i32
    %c0_i32_1 = arith.constant 0 : i32
    return %arg0, %c0_i32, %c0_i32_0 : i32, i32, i32
  }
  func.func @transform_2(%arg0: i32) -> (i32, i32, i32) {
    %c0_i32 = arith.constant 0 : i32
    %c0_i32_0 = arith.constant 0 : i32
    %c0_i32_1 = arith.constant 0 : i32
    return %arg0, %c0_i32, %c0_i32_0 : i32, i32, i32
  }
}

module attributes {stable_mosaic.version = 11 : i64} {
  func.func @_linear_kernel(%arg0: i32, %arg1: i32, %arg2: i32, %arg3: memref<16x32xbf16, #tpu.memory_space<vmem>>, %arg4: memref<32x64xbf16, #tpu.memory_space<vmem>>, %arg5: memref<1x64xf32, #tpu.memory_space<vmem>>, %arg6: memref<16x64xbf16, #tpu.memory_space<vmem>>, %arg7: memref<16x64xf32, #tpu.memory_space<vmem>>) attributes {dimension_semantics = [#tpu.dimension_semantics<parallel>, #tpu.dimension_semantics<parallel>, #tpu.dimension_semantics<arbitrary>], iteration_bounds = array<i64: 1, 1, 1>, scalar_prefetch = 0 : i64, scratch_operands = 1 : i64, tpu.core_type = #tpu.core_type<tc>, window_params = [{transform_indices = @transform_0, window_bounds = array<i64: 16, 32>}, {transform_indices = @transform_1, window_bounds = array<i64: 32, 64>}, {transform_indices = @transform_2, window_bounds = array<i64: 1, 64>}, {transform_indices = @transform_3, window_bounds = array<i64: 16, 64>}]} {
    %c0_i32 = arith.constant 0 : i32
    %0 = arith.cmpi eq, %arg2, %c0_i32 : i32
    %1 = arith.extui %0 : i1 to i32
    %c0_i32_0 = arith.constant 0 : i32
    %2 = arith.cmpi ne, %1, %c0_i32_0 : i32
    scf.if %2 {
      %cst_10 = arith.constant 0.000000e+00 : f32
      %12 = vector.broadcast %cst_10 : f32 to vector<16x64xf32>
      %c0_11 = arith.constant 0 : index
      %c0_12 = arith.constant 0 : index
      %13 = vector.load %arg7[%c0_11, %c0_12] : memref<16x64xf32, #tpu.memory_space<vmem>>, vector<16x64xf32>
      tpu.vector_store %arg7[%c0_11, %c0_12], %12 {strides = array<i32>} : memref<16x64xf32, #tpu.memory_space<vmem>>, vector<16x64xf32>,
    } else {
    }
    %c0 = arith.constant 0 : index
    %c0_1 = arith.constant 0 : index
    %3 = vector.load %arg7[%c0, %c0_1] : memref<16x64xf32, #tpu.memory_space<vmem>>, vector<16x64xf32>
    %c0_2 = arith.constant 0 : index
    %c0_3 = arith.constant 0 : index
    %4 = vector.load %arg3[%c0_2, %c0_3] : memref<16x32xbf16, #tpu.memory_space<vmem>>, vector<16x32xbf16>
    %c0_4 = arith.constant 0 : index
    %c0_5 = arith.constant 0 : index
    %5 = vector.load %arg4[%c0_4, %c0_5] : memref<32x64xbf16, #tpu.memory_space<vmem>>, vector<32x64xbf16>
    %cst = arith.constant dense<0.000000e+00> : vector<16x64xf32>
    %6 = tpu.matmul %4, %5, %cst {dimension_numbers = #tpu.dot_dimension_numbers<[1], [0], [0], [1], [0, 0, 1, 1], [], []>} : vector<16x32xbf16>, vector<32x64xbf16>, vector<16x64xf32> -> vector<16x64xf32>
    %7 = arith.addf %3, %6 : vector<16x64xf32>
    %c0_6 = arith.constant 0 : index
    %c0_7 = arith.constant 0 : index
    %8 = vector.load %arg7[%c0_6, %c0_7] : memref<16x64xf32, #tpu.memory_space<vmem>>, vector<16x64xf32>
    tpu.vector_store %arg7[%c0_6, %c0_7], %7 {strides = array<i32>} : memref<16x64xf32, #tpu.memory_space<vmem>>, vector<16x64xf32>,
    %c0_i32_8 = arith.constant 0 : i32
    %9 = arith.cmpi eq, %arg2, %c0_i32_8 : i32
    %10 = arith.extui %9 : i1 to i32
    %c0_i32_9 = arith.constant 0 : i32
    %11 = arith.cmpi ne, %10, %c0_i32_9 : i32
    scf.if %11 {
      %c0_10 = arith.constant 0 : index
      %c0_11 = arith.constant 0 : index
      %12 = vector.load %arg7[%c0_10, %c0_11] : memref<16x64xf32, #tpu.memory_space<vmem>>, vector<16x64xf32>
      %c0_12 = arith.constant 0 : index
      %c0_13 = arith.constant 0 : index
      %13 = vector.load %arg5[%c0_12, %c0_13] : memref<1x64xf32, #tpu.memory_space<vmem>>, vector<1x64xf32>
      %14 = vector.broadcast %13 : vector<1x64xf32> to vector<16x64xf32>
      %15 = arith.addf %12, %14 : vector<16x64xf32>
      %cst_14 = arith.constant 5.000000e-01 : f32
      %16 = vector.broadcast %cst_14 : f32 to vector<16x64xf32>
      %17 = arith.mulf %16, %15 : vector<16x64xf32>
      %cst_15 = arith.constant 4.471500e-02 : f32
      %18 = vector.broadcast %cst_15 : f32 to vector<16x64xf32>
      %19 = arith.mulf %18, %15 : vector<16x64xf32>
      %20 = arith.mulf %19, %15 : vector<16x64xf32>
      %21 = arith.mulf %20, %15 : vector<16x64xf32>
      %22 = arith.addf %15, %21 : vector<16x64xf32>
      %cst_16 = arith.constant 0.797884583 : f32
      %23 = vector.broadcast %cst_16 : f32 to vector<16x64xf32>
      %24 = arith.mulf %23, %22 : vector<16x64xf32>
      %25 = math.tanh %24 : vector<16x64xf32>
      %cst_17 = arith.constant 1.000000e+00 : f32
      %26 = vector.broadcast %cst_17 : f32 to vector<16x64xf32>
      %27 = arith.addf %26, %25 : vector<16x64xf32>
      %28 = arith.mulf %17, %27 : vector<16x64xf32>
      %29 = arith.truncf %28 : vector<16x64xf32> to vector<16x64xbf16>
      %c0_18 = arith.constant 0 : index
      %c0_19 = arith.constant 0 : index
      %30 = vector.load %arg6[%c0_18, %c0_19] : memref<16x64xbf16, #tpu.memory_space<vmem>>, vector<16x64xbf16>
      tpu.vector_store %arg6[%c0_18, %c0_19], %29 {strides = array<i32>} : memref<16x64xbf16, #tpu.memory_space<vmem>>, vector<16x64xbf16>,
    } else {
    }
    return
  }
  func.func @transform_0(%arg0: i32, %arg1: i32, %arg2: i32) -> (i32, i32) {
    %c0_i32 = arith.constant 0 : i32
    return %arg0, %arg2 : i32, i32
  }
  func.func @transform_1(%arg0: i32, %arg1: i32, %arg2: i32) -> (i32, i32) {
    %c0_i32 = arith.constant 0 : i32
    return %arg2, %arg1 : i32, i32
  }
  func.func @transform_2(%arg0: i32, %arg1: i32, %arg2: i32) -> (i32, i32) {
    %c0_i32 = arith.constant 0 : i32
    %c0_i32_0 = arith.constant 0 : i32
    return %c0_i32, %arg1 : i32, i32
  }
  func.func @transform_3(%arg0: i32, %arg1: i32, %arg2: i32) -> (i32, i32) {
    %c0_i32 = arith.constant 0 : i32
    return %arg0, %arg1 : i32, i32
  }
}

module attributes {stable_mosaic.version = 11 : i64} {
  func.func @_linear_add_ln_kernel(%arg0: i32, %arg1: i32, %arg2: memref<16x64xbf16, #tpu.memory_space<vmem>>, %arg3: memref<64x32xbf16, #tpu.memory_space<vmem>>, %arg4: memref<1x32xf32, #tpu.memory_space<vmem>>, %arg5: memref<16x32xbf16, #tpu.memory_space<vmem>>, %arg6: memref<1x32xf32, #tpu.memory_space<vmem>>, %arg7: memref<1x32xf32, #tpu.memory_space<vmem>>, %arg8: memref<16x32xbf16, #tpu.memory_space<vmem>>, %arg9: memref<16x32xf32, #tpu.memory_space<vmem>>) attributes {dimension_semantics = [#tpu.dimension_semantics<parallel>, #tpu.dimension_semantics<arbitrary>], iteration_bounds = array<i64: 1, 1>, scalar_prefetch = 0 : i64, scratch_operands = 1 : i64, tpu.core_type = #tpu.core_type<tc>, window_params = [{transform_indices = @transform_0, window_bounds = array<i64: 16, 64>}, {transform_indices = @transform_1, window_bounds = array<i64: 64, 32>}, {pipeline_mode = #tpu.pipeline_mode<synchronous>, transform_indices = @transform_2, window_bounds = array<i64: 1, 32>}, {transform_indices = @transform_3, window_bounds = array<i64: 16, 32>}, {pipeline_mode = #tpu.pipeline_mode<synchronous>, transform_indices = @transform_4, window_bounds = array<i64: 1, 32>}, {pipeline_mode = #tpu.pipeline_mode<synchronous>, transform_indices = @transform_5, window_bounds = array<i64: 1, 32>}, {transform_indices = @transform_6, window_bounds = array<i64: 16, 32>}]} {
    %c0_i32 = arith.constant 0 : i32
    %0 = arith.cmpi eq, %arg1, %c0_i32 : i32
    %1 = arith.extui %0 : i1 to i32
    %c0_i32_0 = arith.constant 0 : i32
    %2 = arith.cmpi ne, %1, %c0_i32_0 : i32
    scf.if %2 {
      %cst_10 = arith.constant 0.000000e+00 : f32
      %12 = vector.broadcast %cst_10 : f32 to vector<16x32xf32>
      %c0_11 = arith.constant 0 : index
      %c0_12 = arith.constant 0 : index
      %13 = vector.load %arg9[%c0_11, %c0_12] : memref<16x32xf32, #tpu.memory_space<vmem>>, vector<16x32xf32>
      tpu.vector_store %arg9[%c0_11, %c0_12], %12 {strides = array<i32>} : memref<16x32xf32, #tpu.memory_space<vmem>>, vector<16x32xf32>,
    } else {
    }
    %c0 = arith.constant 0 : index
    %c0_1 = arith.constant 0 : index
    %3 = vector.load %arg9[%c0, %c0_1] : memref<16x32xf32, #tpu.memory_space<vmem>>, vector<16x32xf32>
    %c0_2 = arith.constant 0 : index
    %c0_3 = arith.constant 0 : index
    %4 = vector.load %arg2[%c0_2, %c0_3] : memref<16x64xbf16, #tpu.memory_space<vmem>>, vector<16x64xbf16>
    %c0_4 = arith.constant 0 : index
    %c0_5 = arith.constant 0 : index
    %5 = vector.load %arg3[%c0_4, %c0_5] : memref<64x32xbf16, #tpu.memory_space<vmem>>, vector<64x32xbf16>
    %cst = arith.constant dense<0.000000e+00> : vector<16x32xf32>
    %6 = tpu.matmul %4, %5, %cst {dimension_numbers = #tpu.dot_dimension_numbers<[1], [0], [0], [1], [0, 0, 1, 1], [], []>} : vector<16x64xbf16>, vector<64x32xbf16>, vector<16x32xf32> -> vector<16x32xf32>
    %7 = arith.addf %3, %6 : vector<16x32xf32>
    %c0_6 = arith.constant 0 : index
    %c0_7 = arith.constant 0 : index
    %8 = vector.load %arg9[%c0_6, %c0_7] : memref<16x32xf32, #tpu.memory_space<vmem>>, vector<16x32xf32>
    tpu.vector_store %arg9[%c0_6, %c0_7], %7 {strides = array<i32>} : memref<16x32xf32, #tpu.memory_space<vmem>>, vector<16x32xf32>,
    %c0_i32_8 = arith.constant 0 : i32
    %9 = arith.cmpi eq, %arg1, %c0_i32_8 : i32
    %10 = arith.extui %9 : i1 to i32
    %c0_i32_9 = arith.constant 0 : i32
    %11 = arith.cmpi ne, %10, %c0_i32_9 : i32
    scf.if %11 {
      %c0_10 = arith.constant 0 : index
      %c0_11 = arith.constant 0 : index
      %12 = vector.load %arg9[%c0_10, %c0_11] : memref<16x32xf32, #tpu.memory_space<vmem>>, vector<16x32xf32>
      %c0_12 = arith.constant 0 : index
      %c0_13 = arith.constant 0 : index
      %13 = vector.load %arg4[%c0_12, %c0_13] : memref<1x32xf32, #tpu.memory_space<vmem>>, vector<1x32xf32>
      %14 = vector.broadcast %13 : vector<1x32xf32> to vector<16x32xf32>
      %15 = arith.addf %12, %14 : vector<16x32xf32>
      %c0_14 = arith.constant 0 : index
      %c0_15 = arith.constant 0 : index
      %16 = vector.load %arg5[%c0_14, %c0_15] : memref<16x32xbf16, #tpu.memory_space<vmem>>, vector<16x32xbf16>
      %17 = arith.extf %16 : vector<16x32xbf16> to vector<16x32xf32>
      %18 = arith.addf %15, %17 : vector<16x32xf32>
      %c0_16 = arith.constant 0 : index
      %c0_17 = arith.constant 0 : index
      %19 = vector.load %arg6[%c0_16, %c0_17] : memref<1x32xf32, #tpu.memory_space<vmem>>, vector<1x32xf32>
      %c0_18 = arith.constant 0 : index
      %c0_19 = arith.constant 0 : index
      %20 = vector.load %arg7[%c0_18, %c0_19] : memref<1x32xf32, #tpu.memory_space<vmem>>, vector<1x32xf32>
      %cst_20 = arith.constant dense<0.000000e+00> : vector<16xf32>
      %21 = vector.multi_reduction <add>, %18, %cst_20 [1] : vector<16x32xf32> to vector<16xf32>
      %22 = vector.shape_cast %21 : vector<16xf32> to vector<16x1xf32>
      %cst_21 = arith.constant 3.200000e+01 : f32
      %23 = vector.broadcast %cst_21 : f32 to vector<16x1xf32>
      %24 = arith.divf %22, %23 : vector<16x1xf32>
      %25 = vector.broadcast %24 : vector<16x1xf32> to vector<16x32xf32>
      %26 = arith.subf %18, %25 : vector<16x32xf32>
      %27 = arith.mulf %26, %26 : vector<16x32xf32>
      %cst_22 = arith.constant dense<0.000000e+00> : vector<16xf32>
      %28 = vector.multi_reduction <add>, %27, %cst_22 [1] : vector<16x32xf32> to vector<16xf32>
      %29 = vector.shape_cast %28 : vector<16xf32> to vector<16x1xf32>
      %cst_23 = arith.constant 3.200000e+01 : f32
      %30 = vector.broadcast %cst_23 : f32 to vector<16x1xf32>
      %31 = arith.divf %29, %30 : vector<16x1xf32>
      %cst_24 = arith.constant 9.99999996E-13 : f32
      %32 = vector.broadcast %cst_24 : f32 to vector<16x1xf32>
      %33 = arith.addf %31, %32 : vector<16x1xf32>
      %34 = math.rsqrt %33 : vector<16x1xf32>
      %35 = vector.broadcast %34 : vector<16x1xf32> to vector<16x32xf32>
      %36 = arith.mulf %26, %35 : vector<16x32xf32>
      %37 = vector.broadcast %19 : vector<1x32xf32> to vector<16x32xf32>
      %38 = arith.mulf %36, %37 : vector<16x32xf32>
      %39 = vector.broadcast %20 : vector<1x32xf32> to vector<16x32xf32>
      %40 = arith.addf %38, %39 : vector<16x32xf32>
      %41 = arith.truncf %40 : vector<16x32xf32> to vector<16x32xbf16>
      %c0_25 = arith.constant 0 : index
      %c0_26 = arith.constant 0 : index
      %42 = vector.load %arg8[%c0_25, %c0_26] : memref<16x32xbf16, #tpu.memory_space<vmem>>, vector<16x32xbf16>
      tpu.vector_store %arg8[%c0_25, %c0_26], %41 {strides = array<i32>} : memref<16x32xbf16, #tpu.memory_space<vmem>>, vector<16x32xbf16>,
    } else {
    }
    return
  }
  func.func @transform_0(%arg0: i32, %arg1: i32) -> (i32, i32) {
    %c0_i32 = arith.constant 0 : i32
    return %arg0, %arg1 : i32, i32
  }
  func.func @transform_1(%arg0: i32, %arg1: i32) -> (i32, i32) {
    %c0_i32 = arith.constant 0 : i32
    %c0_i32_0 = arith.constant 0 : i32
    return %arg1, %c0_i32 : i32, i32
  }
  func.func @transform_2(%arg0: i32, %arg1: i32) -> (i32, i32) {
    %c0_i32 = arith.constant 0 : i32
    %c0_i32_0 = arith.constant 0 : i32
    %c0_i32_1 = arith.constant 0 : i32
    return %c0_i32, %c0_i32_0 : i32, i32
  }
  func.func @transform_3(%arg0: i32, %arg1: i32) -> (i32, i32) {
    %c0_i32 = arith.constant 0 : i32
    %c0_i32_0 = arith.constant 0 : i32
    return %arg0, %c0_i32 : i32, i32
  }
  func.func @transform_4(%arg0: i32, %arg1: i32) -> (i32, i32) {
    %c0_i32 = arith.constant 0 : i32
    %c0_i32_0 = arith.constant 0 : i32
    %c0_i32_1 = arith.constant 0 : i32
    return %c0_i32, %c0_i32_0 : i32, i32
  }
  func.func @transform_5(%arg0: i32, %arg1: i32) -> (i32, i32) {
    %c0_i32 = arith.constant 0 : i32
    %c0_i32_0 = arith.constant 0 : i32
    %c0_i32_1 = arith.constant 0 : i32
    return %c0_i32, %c0_i32_0 : i32, i32
  }
  func.func @transform_6(%arg0: i32, %arg1: i32) -> (i32, i32) {
    %c0_i32 = arith.constant 0 : i32
    %c0_i32_0 = arith.constant 0 : i32
    return %arg0, %c0_i32 : i32, i32
  }
}

module attributes {stable_mosaic.version = 11 : i64} {
  func.func @_head_kernel(%arg0: i32, %arg1: memref<2x32xbf16, #tpu.memory_space<vmem>>, %arg2: memref<32x32xbf16, #tpu.memory_space<vmem>>, %arg3: memref<1x32xf32, #tpu.memory_space<vmem>>, %arg4: memref<32x32xbf16, #tpu.memory_space<vmem>>, %arg5: memref<1x32xf32, #tpu.memory_space<vmem>>, %arg6: memref<32x16xbf16, #tpu.memory_space<vmem>>, %arg7: memref<1x16xf32, #tpu.memory_space<vmem>>, %arg8: memref<2x32xf32, #tpu.memory_space<vmem>>, %arg9: memref<2x16xf32, #tpu.memory_space<vmem>>) attributes {dimension_semantics = [#tpu.dimension_semantics<arbitrary>], iteration_bounds = array<i64: 1>, scalar_prefetch = 0 : i64, scratch_operands = 0 : i64, tpu.core_type = #tpu.core_type<tc>, window_params = [{pipeline_mode = #tpu.pipeline_mode<synchronous>, transform_indices = @transform_0, window_bounds = array<i64: 2, 32>}, {pipeline_mode = #tpu.pipeline_mode<synchronous>, transform_indices = @transform_1, window_bounds = array<i64: 32, 32>}, {pipeline_mode = #tpu.pipeline_mode<synchronous>, transform_indices = @transform_2, window_bounds = array<i64: 1, 32>}, {pipeline_mode = #tpu.pipeline_mode<synchronous>, transform_indices = @transform_3, window_bounds = array<i64: 32, 32>}, {pipeline_mode = #tpu.pipeline_mode<synchronous>, transform_indices = @transform_4, window_bounds = array<i64: 1, 32>}, {pipeline_mode = #tpu.pipeline_mode<synchronous>, transform_indices = @transform_5, window_bounds = array<i64: 32, 16>}, {pipeline_mode = #tpu.pipeline_mode<synchronous>, transform_indices = @transform_6, window_bounds = array<i64: 1, 16>}, {pipeline_mode = #tpu.pipeline_mode<synchronous>, transform_indices = @transform_7, window_bounds = array<i64: 2, 32>}, {pipeline_mode = #tpu.pipeline_mode<synchronous>, transform_indices = @transform_8, window_bounds = array<i64: 2, 16>}]} {
    %c0 = arith.constant 0 : index
    %c0_0 = arith.constant 0 : index
    %0 = vector.load %arg1[%c0, %c0_0] : memref<2x32xbf16, #tpu.memory_space<vmem>>, vector<2x32xbf16>
    %c0_1 = arith.constant 0 : index
    %c0_2 = arith.constant 0 : index
    %1 = vector.load %arg2[%c0_1, %c0_2] : memref<32x32xbf16, #tpu.memory_space<vmem>>, vector<32x32xbf16>
    %cst = arith.constant dense<0.000000e+00> : vector<2x32xf32>
    %2 = tpu.matmul %0, %1, %cst {dimension_numbers = #tpu.dot_dimension_numbers<[1], [0], [0], [1], [0, 0, 1, 1], [], []>} : vector<2x32xbf16>, vector<32x32xbf16>, vector<2x32xf32> -> vector<2x32xf32>
    %c0_3 = arith.constant 0 : index
    %c0_4 = arith.constant 0 : index
    %3 = vector.load %arg3[%c0_3, %c0_4] : memref<1x32xf32, #tpu.memory_space<vmem>>, vector<1x32xf32>
    %4 = vector.broadcast %3 : vector<1x32xf32> to vector<2x32xf32>
    %5 = arith.addf %2, %4 : vector<2x32xf32>
    %6 = math.tanh %5 : vector<2x32xf32>
    %c0_5 = arith.constant 0 : index
    %c0_6 = arith.constant 0 : index
    %7 = vector.load %arg8[%c0_5, %c0_6] : memref<2x32xf32, #tpu.memory_space<vmem>>, vector<2x32xf32>
    tpu.vector_store %arg8[%c0_5, %c0_6], %6 {strides = array<i32>} : memref<2x32xf32, #tpu.memory_space<vmem>>, vector<2x32xf32>,
    %8 = arith.truncf %6 : vector<2x32xf32> to vector<2x32xbf16>
    %c0_7 = arith.constant 0 : index
    %c0_8 = arith.constant 0 : index
    %9 = vector.load %arg4[%c0_7, %c0_8] : memref<32x32xbf16, #tpu.memory_space<vmem>>, vector<32x32xbf16>
    %cst_9 = arith.constant dense<0.000000e+00> : vector<2x32xf32>
    %10 = tpu.matmul %8, %9, %cst_9 {dimension_numbers = #tpu.dot_dimension_numbers<[1], [0], [0], [1], [0, 0, 1, 1], [], []>} : vector<2x32xbf16>, vector<32x32xbf16>, vector<2x32xf32> -> vector<2x32xf32>
    %c0_10 = arith.constant 0 : index
    %c0_11 = arith.constant 0 : index
    %11 = vector.load %arg5[%c0_10, %c0_11] : memref<1x32xf32, #tpu.memory_space<vmem>>, vector<1x32xf32>
    %12 = vector.broadcast %11 : vector<1x32xf32> to vector<2x32xf32>
    %13 = arith.addf %10, %12 : vector<2x32xf32>
    %cst_12 = arith.constant 0.000000e+00 : f32
    %14 = vector.broadcast %cst_12 : f32 to vector<2x32xf32>
    %15 = arith.maximumf %13, %14 : vector<2x32xf32>
    %16 = arith.truncf %15 : vector<2x32xf32> to vector<2x32xbf16>
    %c0_13 = arith.constant 0 : index
    %c0_14 = arith.constant 0 : index
    %17 = vector.load %arg6[%c0_13, %c0_14] : memref<32x16xbf16, #tpu.memory_space<vmem>>, vector<32x16xbf16>
    %cst_15 = arith.constant dense<0.000000e+00> : vector<2x16xf32>
    %18 = tpu.matmul %16, %17, %cst_15 {dimension_numbers = #tpu.dot_dimension_numbers<[1], [0], [0], [1], [0, 0, 1, 1], [], []>} : vector<2x32xbf16>, vector<32x16xbf16>, vector<2x16xf32> -> vector<2x16xf32>
    %c0_16 = arith.constant 0 : index
    %c0_17 = arith.constant 0 : index
    %19 = vector.load %arg7[%c0_16, %c0_17] : memref<1x16xf32, #tpu.memory_space<vmem>>, vector<1x16xf32>
    %20 = vector.broadcast %19 : vector<1x16xf32> to vector<2x16xf32>
    %21 = arith.addf %18, %20 : vector<2x16xf32>
    %c0_18 = arith.constant 0 : index
    %c0_19 = arith.constant 0 : index
    %22 = vector.load %arg9[%c0_18, %c0_19] : memref<2x16xf32, #tpu.memory_space<vmem>>, vector<2x16xf32>
    tpu.vector_store %arg9[%c0_18, %c0_19], %21 {strides = array<i32>} : memref<2x16xf32, #tpu.memory_space<vmem>>, vector<2x16xf32>,
    return
  }
  func.func @transform_0(%arg0: i32) -> (i32, i32) {
    %c0_i32 = arith.constant 0 : i32
    %c0_i32_0 = arith.constant 0 : i32
    %c0_i32_1 = arith.constant 0 : i32
    return %c0_i32, %c0_i32_0 : i32, i32
  }
  func.func @transform_1(%arg0: i32) -> (i32, i32) {
    %c0_i32 = arith.constant 0 : i32
    %c0_i32_0 = arith.constant 0 : i32
    %c0_i32_1 = arith.constant 0 : i32
    return %c0_i32, %c0_i32_0 : i32, i32
  }
  func.func @transform_2(%arg0: i32) -> (i32, i32) {
    %c0_i32 = arith.constant 0 : i32
    %c0_i32_0 = arith.constant 0 : i32
    %c0_i32_1 = arith.constant 0 : i32
    return %c0_i32, %c0_i32_0 : i32, i32
  }
  func.func @transform_3(%arg0: i32) -> (i32, i32) {
    %c0_i32 = arith.constant 0 : i32
    %c0_i32_0 = arith.constant 0 : i32
    %c0_i32_1 = arith.constant 0 : i32
    return %c0_i32, %c0_i32_0 : i32, i32
  }
  func.func @transform_4(%arg0: i32) -> (i32, i32) {
    %c0_i32 = arith.constant 0 : i32
    %c0_i32_0 = arith.constant 0 : i32
    %c0_i32_1 = arith.constant 0 : i32
    return %c0_i32, %c0_i32_0 : i32, i32
  }
  func.func @transform_5(%arg0: i32) -> (i32, i32) {
    %c0_i32 = arith.constant 0 : i32
    %c0_i32_0 = arith.constant 0 : i32
    %c0_i32_1 = arith.constant 0 : i32
    return %c0_i32, %c0_i32_0 : i32, i32
  }
  func.func @transform_6(%arg0: i32) -> (i32, i32) {
    %c0_i32 = arith.constant 0 : i32
    %c0_i32_0 = arith.constant 0 : i32
    %c0_i32_1 = arith.constant 0 : i32
    return %c0_i32, %c0_i32_0 : i32, i32
  }
  func.func @transform_7(%arg0: i32) -> (i32, i32) {
    %c0_i32 = arith.constant 0 : i32
    %c0_i32_0 = arith.constant 0 : i32
    %c0_i32_1 = arith.constant 0 : i32
    return %c0_i32, %c0_i32_0 : i32, i32
  }
  func.func @transform_8(%arg0: i32) -> (i32, i32) {
    %c0_i32 = arith.constant 0 : i32
    %c0_i32_0 = arith.constant 0 : i32
    %c0_i32_1 = arith.constant 0 : i32
    return %c0_i32, %c0_i32_0 : i32, i32
  }
}

</mosaic_0001>

<llo_original>
// kernel: bert_embedding_forward.12
$region0: #{bert_embedding_forward.12}
  #allocation0 [shape = 'u32[]', space=smem, size = 0x4, offset = 0x4, fixed_abs, tag = 'smem constant byte address 0x4 - core index']
  #allocation1 [shape = 'u32[144,128]{1,0:T(1,128)}', space=vmem, size = 0x12000, scoped, tag = 'internal scratch']
  %s0 = inlined_call_operand.vmem [shape: f32[16,32], index: 0, kind: input, shape index: {}]
  %s1 = inlined_call_operand.vmem [shape: f32[1,32], index: 1, kind: input, shape index: {}]
  %s2 = inlined_call_operand.vmem [shape: f32[1,32], index: 2, kind: input, shape index: {}]
  %s3 = inlined_call_operand.vmem [shape: bf16[16,32], index: 3, kind: output, shape index: {}]
  %s4 = sld [smem:[#allocation0]]
  $region22: #{bert_embedding_forward.12} parent=0
    _
  %s6 = ssub.s32 1, %s4
  %s7 = scalar_select 0, %s6, %s4
  // Predicated region
  $region2: #{bert_embedding_forward.12} parent=0 // pred_check
    _
  $region3: #{bert_embedding_forward.12} parent=0 // pred_check_branch
    %9 = sbr.rel (0) target = $region5
  $region4: #{bert_embedding_forward.12} parent=0 // pred_region
    _
  $region5: #{bert_embedding_forward.12} parent=0 // pred_fallthru
    _
  // Predicated region
  $region6: #{bert_embedding_forward.12} parent=0 // pred_check
    _
  $region7: #{bert_embedding_forward.12} parent=0 // pred_check_branch
    %11 = sbr.rel (0) target = $region9
  $region8: #{bert_embedding_forward.12} parent=0 // pred_region
    _
  $region9: #{bert_embedding_forward.12} parent=0 // pred_fallthru
    _
  // Predicated region
  $region10: #{bert_embedding_forward.12} parent=0 // pred_check
    _
  $region11: #{bert_embedding_forward.12} parent=0 // pred_check_branch
    %13 = sbr.rel (0) target = $region13
  $region12: #{bert_embedding_forward.12} parent=0 // pred_region
    _
  $region13: #{bert_embedding_forward.12} parent=0 // pred_fallthru
    _
  %v14 = vld [vmem:[%s0] sm:$0xff]
  %v15 = vld [vmem:[%s0 + $0x8] sm:$0xff]
  %v16 = vld [vmem:[%s1] sm:$0x1]
  %v17 = vld [vmem:[%s2] sm:$0x1]
  %vm18 = vcmask 261120
  %v19 = vsel %vm18, %v14, 0.0
  %20 = vadd.xlane.f32.xlu0 %v19
  %v21 = vpop.xlane.xlu0 %20
  %v22 = vsel %vm18, %v15, 0.0
  %23 = vadd.xlane.f32.xlu0 %v22
  %v24 = vpop.xlane.xlu0 %23
  %v25 = vrcp.pop 32.0
  %v26 = vmul.f32 %v21, %v25
  %v27 = vmul.f32 %v24, %v25
  %v28 = vsub.f32 %v14, %v26
  %v29 = vsub.f32 %v15, %v27
  %v30 = vmul.f32 %v28, %v28
  %v31 = vmul.f32 %v29, %v29
  %v32 = vsel %vm18, %v30, 0.0
  %33 = vadd.xlane.f32.xlu0 %v32
  %v34 = vpop.xlane.xlu0 %33
  %v35 = vsel %vm18, %v31, 0.0
  %36 = vadd.xlane.f32.xlu0 %v35
  %v37 = vpop.xlane.xlu0 %36
  %v38 = vmul.f32 %v34, %v25
  %v39 = vmul.f32 %v37, %v25
  %v40 = vadd.f32 %v38, 1e-12
  %v41 = vadd.f32 %v39, 1e-12
  %v42 = vrsqrt.pop %v40
  %v43 = vrsqrt.pop %v41
  %v44 = vmul.f32 %v28, %v42
  %v45 = vmul.f32 %v29, %v43
  %v47 = vlaneseq
  %v48 = vshrl.u32 %v47, 7
  %v49 = vsub.s32 0, %v48
  %v50 = vrot.slane %v16, %v49
  %v52 = vmul.f32 %v44, %v50
  %v53 = vmul.f32 %v45, %v50
  %v55 = vlaneseq
  %v56 = vshrl.u32 %v55, 7
  %v57 = vsub.s32 0, %v56
  %v58 = vrot.slane %v17, %v57
  %v60 = vadd.f32 %v52, %v58
  %v61 = vadd.f32 %v53, %v58
  %v62 = vpack.c.bf16 %v61, %v60
  %v64 = vunpack.c.l.b16 %v62
  %v65 = vunpack.c.h.b16 %v62
  %v66 = vpack.c.b16 %v64, %v64
  %v67 = vpack.c.b16 %v65, %v65
  %vm70 = vcmask 257024
  %71 = vst.msk [vmem:[%s3] sm:$0xf] %vm70, %v66
  %72 = vst.msk [vmem:[%s3 + $0x4] sm:$0xf] %vm70, %v67
  // Predicated region
  $region14: #{bert_embedding_forward.12} parent=0 // pred_check
    _
  $region15: #{bert_embedding_forward.12} parent=0 // pred_check_branch
    %74 = sbr.rel (0) target = $region17
  $region16: #{bert_embedding_forward.12} parent=0 // pred_region
    _
  $region17: #{bert_embedding_forward.12} parent=0 // pred_fallthru
    _
  // Predicated region
  $region18: #{bert_embedding_forward.12} parent=0 // pred_check
    _
  $region19: #{bert_embedding_forward.12} parent=0 // pred_check_branch
    %76 = sbr.rel (0) target = $region21
  $region20: #{bert_embedding_forward.12} parent=0 // pred_region
    _
  $region21: #{bert_embedding_forward.12} parent=0 // pred_fallthru
    _

// kernel: bert_embedding_forward.13
$region0: #{bert_embedding_forward.13}
  #allocation0 [shape = 'u32[]', space=smem, size = 0x4, offset = 0x4, fixed_abs, tag = 'smem constant byte address 0x4 - core index']
  #allocation1 [shape = 'u32[144,128]{1,0:T(1,128)}', space=vmem, size = 0x12000, scoped, tag = 'internal scratch']
  #allocation2 [shape = 'f32[16,96]{1,0:T(8,128)}', space=vmem, size = 0x2000, scoped, tag = 'scratch operand']
  %s0 = inlined_call_operand.vmem [shape: bf16[16,32], index: 0, kind: input, shape index: {}]
  %s1 = inlined_call_operand.vmem [shape: bf16[32,96], index: 1, kind: input, shape index: {}]
  %s2 = inlined_call_operand.vmem [shape: f32[1,96], index: 2, kind: input, shape index: {}]
  %s3 = inlined_call_operand.vmem [shape: bf16[16,96], index: 3, kind: output, shape index: {}]
  %s4 = sld [smem:[#allocation0]]
  $region30: #{bert_embedding_forward.13} parent=0
    _
  %s6 = ssub.s32 1, %s4
  %s7 = scalar_select 0, %s6, %s4
  // Predicated region
  $region2: #{bert_embedding_forward.13} parent=0 // pred_check
    _
  $region3: #{bert_embedding_forward.13} parent=0 // pred_check_branch
    %9 = sbr.rel (0) target = $region5
  $region4: #{bert_embedding_forward.13} parent=0 // pred_region
    _
  $region5: #{bert_embedding_forward.13} parent=0 // pred_fallthru
    _
  // Predicated region
  $region6: #{bert_embedding_forward.13} parent=0 // pred_check
    _
  $region7: #{bert_embedding_forward.13} parent=0 // pred_check_branch
    %11 = sbr.rel (0) target = $region9
  $region8: #{bert_embedding_forward.13} parent=0 // pred_region
    _
  $region9: #{bert_embedding_forward.13} parent=0 // pred_fallthru
    _
  // Predicated region
  $region10: #{bert_embedding_forward.13} parent=0 // pred_check
    _
  $region11: #{bert_embedding_forward.13} parent=0 // pred_check_branch
    %13 = sbr.rel (0) target = $region13
  $region12: #{bert_embedding_forward.13} parent=0 // pred_region
    _
  $region13: #{bert_embedding_forward.13} parent=0 // pred_fallthru
    _
  %p15 = scmp.eq.s32.totalorder 0, 0
  // Predicated region
  $region14: #{bert_embedding_forward.13} parent=0 // pred_check
    %p16 = pneg %p15
  $region15: #{bert_embedding_forward.13} parent=0 // pred_check_branch
    %18 = sbr.rel (%p16) target = $region17
  $region16: #{bert_embedding_forward.13} parent=0 // pred_region
    %vm19 = vcmask 785408
    %20 = vst.msk [vmem:[#allocation2] sm:$0xff] %vm19, 0.0
    %21 = vst.msk [vmem:[#allocation2 + $0x8] sm:$0xff] %vm19, 0.0
  $region17: #{bert_embedding_forward.13} parent=0 // pred_fallthru
    _
  %v22 = vld [vmem:[#allocation2] sm:$0xff]
  %v23 = vld [vmem:[#allocation2 + $0x8] sm:$0xff]
  %v24 = vld [vmem:[%s0] sm:$0xf]
  %v25 = vld [vmem:[%s0 + $0x4] sm:$0xf]
  %v26 = vld [vmem:[%s1] sm:$0xf]
  %v27 = vld [vmem:[%s1 + $0x4] sm:$0xf]
  %v28 = vld [vmem:[%s1 + $0x8] sm:$0xf]
  %v29 = vld [vmem:[%s1 + $0xc] sm:$0xf]
  %v32 = vunpack.c.l.b16 %v24
  %v33 = vunpack.c.l.b16 %v25
  %v34 = vpack.c.b16 %v33, %v32
  %v39 = vunpack.c.l.b16 %v26
  %v40 = vunpack.c.l.b16 %v27
  %v41 = vunpack.c.l.b16 %v28
  %v42 = vunpack.c.l.b16 %v29
  %v43 = vpack.c.b16 %v40, %v39
  %v44 = vpack.c.b16 %v42, %v41
  %vm47 = vcmask 261120
  %v49 = vsel %vm47, %v34, 0
  %51 = vmatprep.subr.bf16.mxu0 0
  %52 = vmatpush1.bf16.msra.mxu0 %v43
  %53 = vmatprep.subr.bf16.mxu0 0
  %54 = vmatpush1.bf16.msra.mxu0 %v44
  %55 = vmatprep.subr.bf16.mxu0 0
  %56 = vmatpush1.bf16.msra.mxu0 0
  %57 = vmatprep.subr.bf16.mxu0 0
  %58 = vmatpush1.bf16.msra.mxu0 0
  %59 = vmatprep.subr.bf16.mxu0 0
  %60 = vmatpush1.bf16.msra.mxu0 0
  %61 = vmatprep.subr.bf16.mxu0 0
  %62 = vmatpush1.bf16.msra.mxu0 0
  %63 = vmatprep.subr.bf16.mxu0 0
  %64 = vmatpush1.bf16.msra.mxu0 0
  %65 = vmatprep.subr.bf16.mxu0 0
  %66 = vmatpush1.bf16.msra.mxu0 0
  %67 = vmatprep.subr.bf16.mxu0 0
  %68 = vmatpush1.bf16.msra.mxu0 0
  %69 = vmatprep.subr.bf16.mxu0 0
  %70 = vmatpush1.bf16.msra.mxu0 0
  %71 = vmatprep.subr.bf16.mxu0 0
  %72 = vmatpush1.bf16.msra.mxu0 0
  %73 = vmatprep.subr.bf16.mxu0 0
  %74 = vmatpush1.bf16.msra.mxu0 0
  %75 = vmatprep.subr.bf16.mxu0 0
  %76 = vmatpush1.bf16.msra.mxu0 0
  %77 = vmatprep.subr.bf16.mxu0 0
  %78 = vmatpush1.bf16.msra.mxu0 0
  %79 = vmatprep.subr.bf16.mxu0 0
  %80 = vmatpush1.bf16.msra.mxu0 0
  %81 = vmatprep.subr.bf16.mxu0 0
  %82 = vmatpush1.bf16.msra.mxu0 0
  %83 = vmatprep.mubr.bf16.mxu0 0
  %84 = vmatmul.mubr.bf16.gmra.mrb[0].mxu0 %v49
  %v85 = vpop.f32.mrb[0].mxu0
  %v86 = vadd.f32 0.0, %v85
  %v87 = vpop.f32.mrb[0].mxu0
  %v88 = vpop.f32.mrb[0].mxu0
  %v89 = vadd.f32 0.0, %v88
  %v90 = vpop.f32.mrb[0].mxu0
  %91 = vdwg.mxu0
  %v92 = vadd.f32 %v22, %v86
  %v93 = vadd.f32 %v23, %v89
  %vm94 = vcmask 785408
  %95 = vst.msk [vmem:[#allocation2] sm:$0xff] %vm94, %v92
  %96 = vst.msk [vmem:[#allocation2 + $0x8] sm:$0xff] %vm94, %v93
  // Predicated region
  $region18: #{bert_embedding_forward.13} parent=0 // pred_check
    %p97 = pneg %p15
  $region19: #{bert_embedding_forward.13} parent=0 // pred_check_branch
    %99 = sbr.rel (%p97) target = $region21
  $region20: #{bert_embedding_forward.13} parent=0 // pred_region
    %v100 = vld [vmem:[#allocation2] sm:$0xff]
    %v101 = vld [vmem:[#allocation2 + $0x8] sm:$0xff]
    %v102 = vld [vmem:[%s2] sm:$0x1]
    %v104 = vlaneseq
    %v105 = vshrl.u32 %v104, 7
    %v106 = vsub.s32 0, %v105
    %v107 = vrot.slane %v102, %v106
    %v109 = vadd.f32 %v100, %v107
    %v110 = vadd.f32 %v101, %v107
    %v111 = vpack.c.bf16 %v110, %v109
    %v113 = vunpack.c.l.b16 %v111
    %v114 = vunpack.c.h.b16 %v111
    %v115 = vpack.c.b16 %v113, %v113
    %v116 = vpack.c.b16 %v114, %v114
    %vm119 = vcmask 781312
    %120 = vst.msk [vmem:[%s3] sm:$0xf] %vm119, %v115
    %121 = vst.msk [vmem:[%s3 + $0x4] sm:$0xf] %vm119, %v116
  $region21: #{bert_embedding_forward.13} parent=0 // pred_fallthru
    _
  // Predicated region
  $region22: #{bert_embedding_forward.13} parent=0 // pred_check
    _
  $region23: #{bert_embedding_forward.13} parent=0 // pred_check_branch
    %123 = sbr.rel (0) target = $region25
  $region24: #{bert_embedding_forward.13} parent=0 // pred_region
    _
  $region25: #{bert_embedding_forward.13} parent=0 // pred_fallthru
    _
  // Predicated region
  $region26: #{bert_embedding_forward.13} parent=0 // pred_check
    _
  $region27: #{bert_embedding_forward.13} parent=0 // pred_check_branch
    %125 = sbr.rel (0) target = $region29
  $region28: #{bert_embedding_forward.13} parent=0 // pred_region
    _
  $region29: #{bert_embedding_forward.13} parent=0 // pred_fallthru
    _

// kernel: bert_embedding_forward.15
$region0: #{bert_embedding_forward.15}
  #allocation0 [shape = 'u32[]', space=smem, size = 0x4, offset = 0x4, fixed_abs, tag = 'smem constant byte address 0x4 - core index']
  #allocation1 [shape = 'u32[144,128]{1,0:T(1,128)}', space=vmem, size = 0x12000, scoped, tag = 'internal scratch']
  #allocation2 [shape = 'f32[16,32]{1,0:T(8,128)}', space=vmem, size = 0x2000, scoped, tag = 'scratch operand']
  %s0 = inlined_call_operand.vmem [shape: bf16[16,32], index: 0, kind: input, shape index: {}]
  %s1 = inlined_call_operand.vmem [shape: bf16[32,32], index: 1, kind: input, shape index: {}]
  %s2 = inlined_call_operand.vmem [shape: f32[1,32], index: 2, kind: input, shape index: {}]
  %s3 = inlined_call_operand.vmem [shape: bf16[16,32], index: 3, kind: input, shape index: {}]
  %s4 = inlined_call_operand.vmem [shape: f32[1,32], index: 4, kind: input, shape index: {}]
  %s5 = inlined_call_operand.vmem [shape: f32[1,32], index: 5, kind: input, shape index: {}]
  %s6 = inlined_call_operand.vmem [shape: bf16[16,32], index: 6, kind: output, shape index: {}]
  %s7 = sld [smem:[#allocation0]]
  $region42: #{bert_embedding_forward.15} parent=0
    _
  %s9 = ssub.s32 1, %s7
  %s10 = scalar_select 0, %s9, %s7
  // Predicated region
  $region2: #{bert_embedding_forward.15} parent=0 // pred_check
    _
  $region3: #{bert_embedding_forward.15} parent=0 // pred_check_branch
    %12 = sbr.rel (0) target = $region5
  $region4: #{bert_embedding_forward.15} parent=0 // pred_region
    _
  $region5: #{bert_embedding_forward.15} parent=0 // pred_fallthru
    _
  // Predicated region
  $region6: #{bert_embedding_forward.15} parent=0 // pred_check
    _
  $region7: #{bert_embedding_forward.15} parent=0 // pred_check_branch
    %14 = sbr.rel (0) target = $region9
  $region8: #{bert_embedding_forward.15} parent=0 // pred_region
    _
  $region9: #{bert_embedding_forward.15} parent=0 // pred_fallthru
    _
  // Predicated region
  $region10: #{bert_embedding_forward.15} parent=0 // pred_check
    _
  $region11: #{bert_embedding_forward.15} parent=0 // pred_check_branch
    %16 = sbr.rel (0) target = $region13
  $region12: #{bert_embedding_forward.15} parent=0 // pred_region
    _
  $region13: #{bert_embedding_forward.15} parent=0 // pred_fallthru
    _
  // Predicated region
  $region14: #{bert_embedding_forward.15} parent=0 // pred_check
    _
  $region15: #{bert_embedding_forward.15} parent=0 // pred_check_branch
    %18 = sbr.rel (0) target = $region17
  $region16: #{bert_embedding_forward.15} parent=0 // pred_region
    _
  $region17: #{bert_embedding_forward.15} parent=0 // pred_fallthru
    _
  // Predicated region
  $region18: #{bert_embedding_forward.15} parent=0 // pred_check
    _
  $region19: #{bert_embedding_forward.15} parent=0 // pred_check_branch
    %20 = sbr.rel (0) target = $region21
  $region20: #{bert_embedding_forward.15} parent=0 // pred_region
    _
  $region21: #{bert_embedding_forward.15} parent=0 // pred_fallthru
    _
  // Predicated region
  $region22: #{bert_embedding_forward.15} parent=0 // pred_check
    _
  $region23: #{bert_embedding_forward.15} parent=0 // pred_check_branch
    %22 = sbr.rel (0) target = $region25
  $region24: #{bert_embedding_forward.15} parent=0 // pred_region
    _
  $region25: #{bert_embedding_forward.15} parent=0 // pred_fallthru
    _
  %p24 = scmp.eq.s32.totalorder 0, 0
  // Predicated region
  $region26: #{bert_embedding_forward.15} parent=0 // pred_check
    %p25 = pneg %p24
  $region27: #{bert_embedding_forward.15} parent=0 // pred_check_branch
    %27 = sbr.rel (%p25) target = $region29
  $region28: #{bert_embedding_forward.15} parent=0 // pred_region
    %vm28 = vcmask 261120
    %29 = vst.msk [vmem:[#allocation2] sm:$0xff] %vm28, 0.0
    %30 = vst.msk [vmem:[#allocation2 + $0x8] sm:$0xff] %vm28, 0.0
  $region29: #{bert_embedding_forward.15} parent=0 // pred_fallthru
    _
  %v31 = vld [vmem:[#allocation2] sm:$0xff]
  %v32 = vld [vmem:[#allocation2 + $0x8] sm:$0xff]
  %v33 = vld [vmem:[%s0] sm:$0xf]
  %v34 = vld [vmem:[%s0 + $0x4] sm:$0xf]
  %v35 = vld [vmem:[%s1] sm:$0xf]
  %v36 = vld [vmem:[%s1 + $0x4] sm:$0xf]
  %v37 = vld [vmem:[%s1 + $0x8] sm:$0xf]
  %v38 = vld [vmem:[%s1 + $0xc] sm:$0xf]
  %v41 = vunpack.c.l.b16 %v33
  %v42 = vunpack.c.l.b16 %v34
  %v43 = vpack.c.b16 %v42, %v41
  %v48 = vunpack.c.l.b16 %v35
  %v49 = vunpack.c.l.b16 %v36
  %v50 = vunpack.c.l.b16 %v37
  %v51 = vunpack.c.l.b16 %v38
  %v52 = vpack.c.b16 %v49, %v48
  %v53 = vpack.c.b16 %v51, %v50
  %vm56 = vcmask 261120
  %v58 = vsel %vm56, %v43, 0
  %60 = vmatprep.subr.bf16.mxu0 0
  %61 = vmatpush1.bf16.msra.mxu0 %v52
  %62 = vmatprep.subr.bf16.mxu0 0
  %63 = vmatpush1.bf16.msra.mxu0 %v53
  %64 = vmatprep.subr.bf16.mxu0 0
  %65 = vmatpush1.bf16.msra.mxu0 0
  %66 = vmatprep.subr.bf16.mxu0 0
  %67 = vmatpush1.bf16.msra.mxu0 0
  %68 = vmatprep.subr.bf16.mxu0 0
  %69 = vmatpush1.bf16.msra.mxu0 0
  %70 = vmatprep.subr.bf16.mxu0 0
  %71 = vmatpush1.bf16.msra.mxu0 0
  %72 = vmatprep.subr.bf16.mxu0 0
  %73 = vmatpush1.bf16.msra.mxu0 0
  %74 = vmatprep.subr.bf16.mxu0 0
  %75 = vmatpush1.bf16.msra.mxu0 0
  %76 = vmatprep.subr.bf16.mxu0 0
  %77 = vmatpush1.bf16.msra.mxu0 0
  %78 = vmatprep.subr.bf16.mxu0 0
  %79 = vmatpush1.bf16.msra.mxu0 0
  %80 = vmatprep.subr.bf16.mxu0 0
  %81 = vmatpush1.bf16.msra.mxu0 0
  %82 = vmatprep.subr.bf16.mxu0 0
  %83 = vmatpush1.bf16.msra.mxu0 0
  %84 = vmatprep.subr.bf16.mxu0 0
  %85 = vmatpush1.bf16.msra.mxu0 0
  %86 = vmatprep.subr.bf16.mxu0 0
  %87 = vmatpush1.bf16.msra.mxu0 0
  %88 = vmatprep.subr.bf16.mxu0 0
  %89 = vmatpush1.bf16.msra.mxu0 0
  %90 = vmatprep.subr.bf16.mxu0 0
  %91 = vmatpush1.bf16.msra.mxu0 0
  %92 = vmatprep.mubr.bf16.mxu0 0
  %93 = vmatmul.mubr.bf16.gmra.mrb[0].mxu0 %v58
  %v94 = vpop.f32.mrb[0].mxu0
  %v95 = vadd.f32 0.0, %v94
  %v96 = vpop.f32.mrb[0].mxu0
  %v97 = vpop.f32.mrb[0].mxu0
  %v98 = vadd.f32 0.0, %v97
  %v99 = vpop.f32.mrb[0].mxu0
  %100 = vdwg.mxu0
  %v101 = vadd.f32 %v31, %v95
  %v102 = vadd.f32 %v32, %v98
  %103 = vst.msk [vmem:[#allocation2] sm:$0xff] %vm56, %v101
  %104 = vst.msk [vmem:[#allocation2 + $0x8] sm:$0xff] %vm56, %v102
  // Predicated region
  $region30: #{bert_embedding_forward.15} parent=0 // pred_check
    %p105 = pneg %p24
  $region31: #{bert_embedding_forward.15} parent=0 // pred_check_branch
    %107 = sbr.rel (%p105) target = $region33
  $region32: #{bert_embedding_forward.15} parent=0 // pred_region
    %v108 = vld [vmem:[#allocation2] sm:$0xff]
    %v109 = vld [vmem:[#allocation2 + $0x8] sm:$0xff]
    %v110 = vld [vmem:[%s2] sm:$0x1]
    %v112 = vlaneseq
    %v113 = vshrl.u32 %v112, 7
    %v114 = vsub.s32 0, %v113
    %v115 = vrot.slane %v110, %v114
    %v117 = vadd.f32 %v108, %v115
    %v118 = vadd.f32 %v109, %v115
    %v119 = vld [vmem:[%s3] sm:$0xf]
    %v120 = vld [vmem:[%s3 + $0x4] sm:$0xf]
    %v121 = vunpack.c.l.bf16 %v119
    %v122 = vunpack.c.l.bf16 %v120
    %v123 = vadd.f32 %v117, %v121
    %v124 = vadd.f32 %v118, %v122
    %v125 = vld [vmem:[%s4] sm:$0x1]
    %v126 = vld [vmem:[%s5] sm:$0x1]
    %v127 = vsel %vm56, %v123, 0.0
    %128 = vadd.xlane.f32.xlu0 %v127
    %v129 = vpop.xlane.xlu0 %128
    %v130 = vsel %vm56, %v124, 0.0
    %131 = vadd.xlane.f32.xlu0 %v130
    %v132 = vpop.xlane.xlu0 %131
    %v133 = vrcp.pop 32.0
    %v134 = vmul.f32 %v129, %v133
    %v135 = vmul.f32 %v132, %v133
    %v136 = vsub.f32 %v123, %v134
    %v137 = vsub.f32 %v124, %v135
    %v138 = vmul.f32 %v136, %v136
    %v139 = vmul.f32 %v137, %v137
    %v140 = vsel %vm56, %v138, 0.0
    %141 = vadd.xlane.f32.xlu0 %v140
    %v142 = vpop.xlane.xlu0 %141
    %v143 = vsel %vm56, %v139, 0.0
    %144 = vadd.xlane.f32.xlu0 %v143
    %v145 = vpop.xlane.xlu0 %144
    %v146 = vmul.f32 %v142, %v133
    %v147 = vmul.f32 %v145, %v133
    %v148 = vadd.f32 %v146, 1e-12
    %v149 = vadd.f32 %v147, 1e-12
    %v150 = vrsqrt.pop %v148
    %v151 = vrsqrt.pop %v149
    %v152 = vmul.f32 %v136, %v150
    %v153 = vmul.f32 %v137, %v151
    %v155 = vlaneseq
    %v156 = vshrl.u32 %v155, 7
    %v157 = vsub.s32 0, %v156
    %v158 = vrot.slane %v125, %v157
    %v160 = vmul.f32 %v152, %v158
    %v161 = vmul.f32 %v153, %v158
    %v163 = vlaneseq
    %v164 = vshrl.u32 %v163, 7
    %v165 = vsub.s32 0, %v164
    %v166 = vrot.slane %v126, %v165
    %v168 = vadd.f32 %v160, %v166
    %v169 = vadd.f32 %v161, %v166
    %v170 = vpack.c.bf16 %v169, %v168
    %v172 = vunpack.c.l.b16 %v170
    %v173 = vunpack.c.h.b16 %v170
    %v174 = vpack.c.b16 %v172, %v172
    %v175 = vpack.c.b16 %v173, %v173
    %vm178 = vcmask 257024
    %179 = vst.msk [vmem:[%s6] sm:$0xf] %vm178, %v174
    %180 = vst.msk [vmem:[%s6 + $0x4] sm:$0xf] %vm178, %v175
  $region33: #{bert_embedding_forward.15} parent=0 // pred_fallthru
    _
  // Predicated region
  $region34: #{bert_embedding_forward.15} parent=0 // pred_check
    _
  $region35: #{bert_embedding_forward.15} parent=0 // pred_check_branch
    %182 = sbr.rel (0) target = $region37
  $region36: #{bert_embedding_forward.15} parent=0 // pred_region
    _
  $region37: #{bert_embedding_forward.15} parent=0 // pred_fallthru
    _
  // Predicated region
  $region38: #{bert_embedding_forward.15} parent=0 // pred_check
    _
  $region39: #{bert_embedding_forward.15} parent=0 // pred_check_branch
    %184 = sbr.rel (0) target = $region41
  $region40: #{bert_embedding_forward.15} parent=0 // pred_region
    _
  $region41: #{bert_embedding_forward.15} parent=0 // pred_fallthru
    _

// kernel: bert_embedding_forward.14
$region0: #{bert_embedding_forward.14}
  #allocation0 [shape = 'u32[]', space=smem, size = 0x4, offset = 0x4, fixed_abs, tag = 'smem constant byte address 0x4 - core index']
  #allocation1 [shape = 'u32[144,128]{1,0:T(1,128)}', space=vmem, size = 0x12000, scoped, tag = 'internal scratch']
  %s0 = inlined_call_operand.vmem [shape: bf16[2,8,96], index: 0, kind: input, shape index: {}]
  %s1 = inlined_call_operand.vmem [shape: f32[2,1,8], index: 1, kind: input, shape index: {}]
  %s2 = inlined_call_operand.vmem [shape: bf16[2,8,32], index: 2, kind: output, shape index: {}]
  %s3 = sld [smem:[#allocation0]]
  $region41: #{bert_embedding_forward.14} parent=0
    _
  %s5 = ssub.s32 1, %s3
  %s6 = scalar_select 0, %s5, %s3
  loop: start=0, step=1, limit=4
  $region2: #{bert_embedding_forward.14} parent=0 // loop_pre_header
    _
  $region3: #{bert_embedding_forward.14} parent=0 // loop_header
    %s8 = sphi 0, %s12
    %p9 = scmp.ge.s32.totalorder %s8, 4
    %s18 = sphi 0, %s20
    %s21 = sphi 0, %s18
    %s22 = sphi 0, %s21
    %s38 = sphi 0, %s22
    %s44 = sphi 0, %s46
    %s47 = sphi 0, %s44
    %s48 = sphi 0, %s47
    %s64 = sphi 0, %s48
    %s70 = sphi 0, %s72
    %s73 = sphi 0, %s70
    %s74 = sphi 0, %s73
    %s90 = sphi 0, %s74
  $region4: #{bert_embedding_forward.14} parent=0 // loop_header_branch
    %11 = sbr.rel (%p9) target = $region8
  $region5: #{bert_embedding_forward.14} parent=0 // loop_body
    %s13 = ssub.s32 %s8, 1
    %s14 = ssub.s32 %s8, 2
    %s15 = sadd.s32 %s8, 1
    %s16 = ssub.s32 %s8, %s15
    %p17 = scmp.eq.s32.totalorder %s16, 0
    %s19 = sadd.s32 %s18, 1
    %s20 = scalar_select %p17, %s18, %s19
    %p23 = pneg %p17
    %p24 = scmp.eq.s32.totalorder %s8, 1
    %p25 = por %p23, %p24
    %p26 = scmp.ne.s32.totalorder %s18, %s21
    %p27 = scmp.eq.s32.totalorder %s8, 0
    %p28 = por %p26, %p27
    %p29 = scmp.ne.s32.totalorder %s18, %s21
    %p30 = scmp.eq.s32.totalorder %s13, 1
    %p31 = por %p29, %p30
    %p32 = scmp.ne.s32.totalorder %s21, %s22
    %p33 = scmp.eq.s32.totalorder %s13, 0
    %p34 = por %p32, %p33
    %p35 = scmp.ne.s32.totalorder %s21, %s22
    %p36 = scmp.eq.s32.totalorder %s14, 1
    %p37 = por %p35, %p36
    %p39 = scmp.ne.s32.totalorder %s22, %s38
    %p40 = scmp.eq.s32.totalorder %s14, 0
    %p41 = por %p39, %p40
    %s42 = ssub.s32 %s8, %s15
    %p43 = scmp.eq.s32.totalorder %s42, 0
    %s45 = sadd.s32 %s44, 1
    %s46 = scalar_select %p43, %s44, %s45
    %p49 = pneg %p43
    %p50 = scmp.eq.s32.totalorder %s8, 1
    %p51 = por %p49, %p50
    %p52 = scmp.ne.s32.totalorder %s44, %s47
    %p53 = scmp.eq.s32.totalorder %s8, 0
    %p54 = por %p52, %p53
    %p55 = scmp.ne.s32.totalorder %s44, %s47
    %p56 = scmp.eq.s32.totalorder %s13, 1
    %p57 = por %p55, %p56
    %p58 = scmp.ne.s32.totalorder %s47, %s48
    %p59 = scmp.eq.s32.totalorder %s13, 0
    %p60 = por %p58, %p59
    %p61 = scmp.ne.s32.totalorder %s47, %s48
    %p62 = scmp.eq.s32.totalorder %s14, 1
    %p63 = por %p61, %p62
    %p65 = scmp.ne.s32.totalorder %s48, %s64
    %p66 = scmp.eq.s32.totalorder %s14, 0
    %p67 = por %p65, %p66
    %s68 = ssub.s32 %s8, %s15
    %p69 = scmp.eq.s32.totalorder %s68, 0
    %s71 = sadd.s32 %s70, 1
    %s72 = scalar_select %p69, %s70, %s71
    %p75 = pneg %p69
    %p76 = scmp.eq.s32.totalorder %s8, 1
    %p77 = por %p75, %p76
    %p78 = scmp.ne.s32.totalorder %s70, %s73
    %p79 = scmp.eq.s32.totalorder %s8, 0
    %p80 = por %p78, %p79
    %p81 = scmp.ne.s32.totalorder %s70, %s73
    %p82 = scmp.eq.s32.totalorder %s13, 1
    %p83 = por %p81, %p82
    %p84 = scmp.ne.s32.totalorder %s73, %s74
    %p85 = scmp.eq.s32.totalorder %s13, 0
    %p86 = por %p84, %p85
    %p87 = scmp.ne.s32.totalorder %s73, %s74
    %p88 = scmp.eq.s32.totalorder %s14, 1
    %p89 = por %p87, %p88
    %p91 = scmp.ne.s32.totalorder %s74, %s90
    %p92 = scmp.eq.s32.totalorder %s14, 0
    %p93 = por %p91, %p92
    %p94 = scmp.le.s32.totalorder 1, %s8
    %p95 = scmp.lt.s32.totalorder %s8, 3
    %p96 = pnand %p94, %p95
    %p97 = pneg %p96
    // Predicated region
    $region9: #{bert_embedding_forward.14} parent=5 // pred_check
      _
    $region10: #{bert_embedding_forward.14} parent=5 // pred_check_branch
      %99 = sbr.rel (%p96) target = $region12
    $region11: #{bert_embedding_forward.14} parent=5 // pred_region
      %s100 = ssub.s32 %s8, 1
    $region12: #{bert_embedding_forward.14} parent=5 // pred_fallthru
      _
    %p101 = scmp.lt.s32.totalorder %s8, 2
    // Predicated region
    $region13: #{bert_embedding_forward.14} parent=5 // pred_check
      %p102 = pneg %p101
    $region14: #{bert_embedding_forward.14} parent=5 // pred_check_branch
      %104 = sbr.rel (%p102) target = $region16
    $region15: #{bert_embedding_forward.14} parent=5 // pred_region
      // Predicated region
      $region17: #{bert_embedding_forward.14} parent=15 // pred_check
        %p105 = pneg %p28
      $region18: #{bert_embedding_forward.14} parent=15 // pred_check_branch
        %107 = sbr.rel (%p105) target = $region20
      $region19: #{bert_embedding_forward.14} parent=15 // pred_region
        %p108 = scmp.lt.s32.totalorder %s8, 1
        %s109 = scalar_select %p108, %s8, 1
        %s110 = smul.addr %s109, 4
        %s111 = scalar_lea.vmem %s0, %s110
      $region20: #{bert_embedding_forward.14} parent=15 // pred_fallthru
        _
      // Predicated region
      $region21: #{bert_embedding_forward.14} parent=15 // pred_check
        %p112 = pneg %p54
      $region22: #{bert_embedding_forward.14} parent=15 // pred_check_branch
        %114 = sbr.rel (%p112) target = $region24
      $region23: #{bert_embedding_forward.14} parent=15 // pred_region
        %p115 = scmp.lt.s32.totalorder %s8, 1
        %s116 = scalar_select %p115, %s8, 1
        %s117 = scalar_lea.vmem %s1, %s116
      $region24: #{bert_embedding_forward.14} parent=15 // pred_fallthru
        _
    $region16: #{bert_embedding_forward.14} parent=5 // pred_fallthru
      _
    %p118 = scmp.le.s32.totalorder 1, %s8
    %p119 = scmp.lt.s32.totalorder %s8, 3
    %p120 = pnand %p118, %p119
    %p121 = pneg %p120
    // Predicated region
    $region25: #{bert_embedding_forward.14} parent=5 // pred_check
      _
    $region26: #{bert_embedding_forward.14} parent=5 // pred_check_branch
      %123 = sbr.rel (%p120) target = $region28
    $region27: #{bert_embedding_forward.14} parent=5 // pred_region
      %s124 = ssub.s32 %s8, 1
      %p125 = scmp.lt.s32.totalorder %s13, 1
      %s126 = scalar_select %p125, %s13, 1
      %s127 = smul.addr %s126, 4
      %s128 = scalar_lea.vmem %s0, %s127
      %p129 = pneg %p34
      %p130 = pneg %p31
      %p131 = scmp.lt.s32.totalorder %s13, 1
      %s132 = scalar_select %p131, %s13, 1
      %s133 = scalar_lea.vmem %s1, %s132
      %p134 = pneg %p60
      %p135 = pneg %p57
      %p136 = pneg %p86
      %p137 = pneg %p83
      %p138 = scmp.lt.s32.totalorder %s13, 1
      %s139 = scalar_select %p138, %s13, 1
      %s140 = smul.addr %s139, 4
      %s141 = scalar_lea.vmem %s2, %s140
      %p142 = scmp.lt.s32.totalorder %s13, 1
      %s143 = scalar_select %p142, %s13, 1
      %s144 = smul.addr %s143, 4
      %s145 = scalar_lea.vmem %s0, %s144
      %p146 = scmp.lt.s32.totalorder %s13, 1
      %s147 = scalar_select %p146, %s13, 1
      %s148 = scalar_lea.vmem %s1, %s147
      %p149 = scmp.lt.s32.totalorder %s13, 1
      %s150 = scalar_select %p149, %s13, 1
      %s151 = smul.addr %s150, 4
      %s152 = scalar_lea.vmem %s2, %s151
      %v155 = vld [vmem:[%s145] sm:$0xf]
      %v156 = vld [vmem:[%s148] sm:$0x1]
      %v157 = vmul.bf16 %v155, 1052065461
      %v159 = vlaneseq
      %v160 = vshrl.u32 %v159, 7
      %v161 = vsub.s32 0, %v160
      %v162 = vrot.slane %v156, %v161
      %v165 = vunpack.c.l.b16 %v155
      %v166 = vpack.c.b16 %v165, %v165
      %167 = vrot.lane.b32.xlu0 %v166, 96
      %v168 = vpop.permute.xlu0 %167
      %vm169 = vcmask 64512
      %v171 = vsel %vm169, %v157, 0
      %v174 = vsel %vm169, %v168, 0
      %176 = vmatprep.subr.bf16.mxu0 0
      %177 = vmatpush1.bf16.xpose.msra.mxu0 %v174
      %178 = vmatprep.subr.bf16.mxu0 0
      %179 = vmatpush1.bf16.xpose.msra.mxu0 0
      %180 = vmatprep.subr.bf16.mxu0 0
      %181 = vmatpush1.bf16.xpose.msra.mxu0 0
      %182 = vmatprep.subr.bf16.mxu0 0
      %183 = vmatpush1.bf16.xpose.msra.mxu0 0
      %184 = vmatprep.subr.bf16.mxu0 0
      %185 = vmatpush1.bf16.xpose.msra.mxu0 0
      %186 = vmatprep.subr.bf16.mxu0 0
      %187 = vmatpush1.bf16.xpose.msra.mxu0 0
      %188 = vmatprep.subr.bf16.mxu0 0
      %189 = vmatpush1.bf16.xpose.msra.mxu0 0
      %190 = vmatprep.subr.bf16.mxu0 0
      %191 = vmatpush1.bf16.xpose.msra.mxu0 0
      %192 = vmatprep.subr.bf16.mxu0 0
      %193 = vmatpush1.bf16.xpose.msra.mxu0 0
      %194 = vmatprep.subr.bf16.mxu0 0
      %195 = vmatpush1.bf16.xpose.msra.mxu0 0
      %196 = vmatprep.subr.bf16.mxu0 0
      %197 = vmatpush1.bf16.xpose.msra.mxu0 0
      %198 = vmatprep.subr.bf16.mxu0 0
      %199 = vmatpush1.bf16.xpose.msra.mxu0 0
      %200 = vmatprep.subr.bf16.mxu0 0
      %201 = vmatpush1.bf16.xpose.msra.mxu0 0
      %202 = vmatprep.subr.bf16.mxu0 0
      %203 = vmatpush1.bf16.xpose.msra.mxu0 0
      %204 = vmatprep.subr.bf16.mxu0 0
      %205 = vmatpush1.bf16.xpose.msra.mxu0 0
      %206 = vmatprep.subr.bf16.mxu0 0
      %207 = vmatpush1.bf16.xpose.msra.mxu0 0
      %208 = vmatprep.mubr.bf16.mxu0 0
      %209 = vmatmul.mubr.bf16.gmra.mrb[0].mxu0 %v171
      %v210 = vpop.f32.mrb[0].mxu0
      %v211 = vadd.f32 %v162, %v210
      %v212 = vpop.f32.mrb[0].mxu0
      %v213 = vpop.f32.mrb[0].mxu0
      %v214 = vpop.f32.mrb[0].mxu0
      %215 = vdwg.mxu0
      %v216 = vsel %vm169, %v211, -inf
      %217 = vmax.xlane.f32.xlu0 %v216
      %v218 = vpop.xlane.xlu0 %217
      %v219 = vsub.f32 %v211, %v218
      %v220 = vmul.f32 %v219, 1.442695
      %v221 = vpow.pop %v220
      %v222 = vsel %vm169, %v221, 0.0
      %223 = vadd.xlane.f32.xlu0 %v222
      %v224 = vpop.xlane.xlu0 %223
      %v225 = vrcp.pop %v224
      %v226 = vmul.f32 %v221, %v225
      %v227 = vpack.c.bf16 %v226, %v226
      %228 = vrot.lane.b32.xlu0 %v166, 64
      %v229 = vpop.permute.xlu0 %228
      %v231 = vsel %vm169, %v227, 0
      %vm233 = vcmask 1043456
      %v235 = vsel %vm233, %v229, 0
      %237 = vmatprep.subr.bf16.mxu0 0
      %238 = vmatpush1.bf16.msra.mxu0 %v235
      %239 = vmatprep.subr.bf16.mxu0 0
      %240 = vmatpush1.bf16.msra.mxu0 0
      %241 = vmatprep.subr.bf16.mxu0 0
      %242 = vmatpush1.bf16.msra.mxu0 0
      %243 = vmatprep.subr.bf16.mxu0 0
      %244 = vmatpush1.bf16.msra.mxu0 0
      %245 = vmatprep.subr.bf16.mxu0 0
      %246 = vmatpush1.bf16.msra.mxu0 0
      %247 = vmatprep.subr.bf16.mxu0 0
      %248 = vmatpush1.bf16.msra.mxu0 0
      %249 = vmatprep.subr.bf16.mxu0 0
      %250 = vmatpush1.bf16.msra.mxu0 0
      %251 = vmatprep.subr.bf16.mxu0 0
      %252 = vmatpush1.bf16.msra.mxu0 0
      %253 = vmatprep.subr.bf16.mxu0 0
      %254 = vmatpush1.bf16.msra.mxu0 0
      %255 = vmatprep.subr.bf16.mxu0 0
      %256 = vmatpush1.bf16.msra.mxu0 0
      %257 = vmatprep.subr.bf16.mxu0 0
      %258 = vmatpush1.bf16.msra.mxu0 0
      %259 = vmatprep.subr.bf16.mxu0 0
      %260 = vmatpush1.bf16.msra.mxu0 0
      %261 = vmatprep.subr.bf16.mxu0 0
      %262 = vmatpush1.bf16.msra.mxu0 0
      %263 = vmatprep.subr.bf16.mxu0 0
      %264 = vmatpush1.bf16.msra.mxu0 0
      %265 = vmatprep.subr.bf16.mxu0 0
      %266 = vmatpush1.bf16.msra.mxu0 0
      %267 = vmatprep.subr.bf16.mxu0 0
      %268 = vmatpush1.bf16.msra.mxu0 0
      %269 = vmatprep.mubr.bf16.mxu0 0
      %270 = vmatmul.mubr.bf16.gmra.mrb[0].mxu0 %v231
      %v271 = vpop.f32.mrb[0].mxu0
      %v272 = vadd.f32 0.0, %v271
      %v273 = vpop.f32.mrb[0].mxu0
      %v274 = vpop.f32.mrb[0].mxu0
      %v275 = vpop.f32.mrb[0].mxu0
      %276 = vdwg.mxu0
      %v278 = vunpack.c.l.b16 %v157
      %v279 = vpack.c.b16 %v278, %v278
      %280 = vrot.lane.b32.xlu0 %v279, 120
      %v281 = vpop.permute.xlu0 %280
      %282 = vrot.lane.b32.xlu0 %v166, 88
      %v283 = vpop.permute.xlu0 %282
      %v285 = vsel %vm169, %v281, 0
      %v288 = vsel %vm169, %v283, 0
      %290 = vmatprep.subr.bf16.mxu0 0
      %291 = vmatpush1.bf16.xpose.msra.mxu0 %v288
      %292 = vmatprep.subr.bf16.mxu0 0
      %293 = vmatpush1.bf16.xpose.msra.mxu0 0
      %294 = vmatprep.subr.bf16.mxu0 0
      %295 = vmatpush1.bf16.xpose.msra.mxu0 0
      %296 = vmatprep.subr.bf16.mxu0 0
      %297 = vmatpush1.bf16.xpose.msra.mxu0 0
      %298 = vmatprep.subr.bf16.mxu0 0
      %299 = vmatpush1.bf16.xpose.msra.mxu0 0
      %300 = vmatprep.subr.bf16.mxu0 0
      %301 = vmatpush1.bf16.xpose.msra.mxu0 0
      %302 = vmatprep.subr.bf16.mxu0 0
      %303 = vmatpush1.bf16.xpose.msra.mxu0 0
      %304 = vmatprep.subr.bf16.mxu0 0
      %305 = vmatpush1.bf16.xpose.msra.mxu0 0
      %306 = vmatprep.subr.bf16.mxu0 0
      %307 = vmatpush1.bf16.xpose.msra.mxu0 0
      %308 = vmatprep.subr.bf16.mxu0 0
      %309 = vmatpush1.bf16.xpose.msra.mxu0 0
      %310 = vmatprep.subr.bf16.mxu0 0
      %311 = vmatpush1.bf16.xpose.msra.mxu0 0
      %312 = vmatprep.subr.bf16.mxu0 0
      %313 = vmatpush1.bf16.xpose.msra.mxu0 0
      %314 = vmatprep.subr.bf16.mxu0 0
      %315 = vmatpush1.bf16.xpose.msra.mxu0 0
      %316 = vmatprep.subr.bf16.mxu0 0
      %317 = vmatpush1.bf16.xpose.msra.mxu0 0
      %318 = vmatprep.subr.bf16.mxu0 0
      %319 = vmatpush1.bf16.xpose.msra.mxu0 0
      %320 = vmatprep.subr.bf16.mxu0 0
      %321 = vmatpush1.bf16.xpose.msra.mxu0 0
      %322 = vmatprep.mubr.bf16.mxu0 0
      %323 = vmatmul.mubr.bf16.gmra.mrb[0].mxu0 %v285
      %v324 = vpop.f32.mrb[0].mxu0
      %v325 = vadd.f32 %v162, %v324
      %v326 = vpop.f32.mrb[0].mxu0
      %v327 = vpop.f32.mrb[0].mxu0
      %v328 = vpop.f32.mrb[0].mxu0
      %329 = vdwg.mxu0
      %v330 = vsel %vm169, %v325, -inf
      %331 = vmax.xlane.f32.xlu0 %v330
      %v332 = vpop.xlane.xlu0 %331
      %v333 = vsub.f32 %v325, %v332
      %v334 = vmul.f32 %v333, 1.442695
      %v335 = vpow.pop %v334
      %v336 = vsel %vm169, %v335, 0.0
      %337 = vadd.xlane.f32.xlu0 %v336
      %v338 = vpop.xlane.xlu0 %337
      %v339 = vrcp.pop %v338
      %v340 = vmul.f32 %v335, %v339
      %v341 = vpack.c.bf16 %v340, %v340
      %342 = vrot.lane.b32.xlu0 %v166, 56
      %v343 = vpop.permute.xlu0 %342
      %v345 = vsel %vm169, %v341, 0
      %v348 = vsel %vm233, %v343, 0
      %350 = vmatprep.subr.bf16.mxu0 0
      %351 = vmatpush1.bf16.msra.mxu0 %v348
      %352 = vmatprep.subr.bf16.mxu0 0
      %353 = vmatpush1.bf16.msra.mxu0 0
      %354 = vmatprep.subr.bf16.mxu0 0
      %355 = vmatpush1.bf16.msra.mxu0 0
      %356 = vmatprep.subr.bf16.mxu0 0
      %357 = vmatpush1.bf16.msra.mxu0 0
      %358 = vmatprep.subr.bf16.mxu0 0
      %359 = vmatpush1.bf16.msra.mxu0 0
      %360 = vmatprep.subr.bf16.mxu0 0
      %361 = vmatpush1.bf16.msra.mxu0 0
      %362 = vmatprep.subr.bf16.mxu0 0
      %363 = vmatpush1.bf16.msra.mxu0 0
      %364 = vmatprep.subr.bf16.mxu0 0
      %365 = vmatpush1.bf16.msra.mxu0 0
      %366 = vmatprep.subr.bf16.mxu0 0
      %367 = vmatpush1.bf16.msra.mxu0 0
      %368 = vmatprep.subr.bf16.mxu0 0
      %369 = vmatpush1.bf16.msra.mxu0 0
      %370 = vmatprep.subr.bf16.mxu0 0
      %371 = vmatpush1.bf16.msra.mxu0 0
      %372 = vmatprep.subr.bf16.mxu0 0
      %373 = vmatpush1.bf16.msra.mxu0 0
      %374 = vmatprep.subr.bf16.mxu0 0
      %375 = vmatpush1.bf16.msra.mxu0 0
      %376 = vmatprep.subr.bf16.mxu0 0
      %377 = vmatpush1.bf16.msra.mxu0 0
      %378 = vmatprep.subr.bf16.mxu0 0
      %379 = vmatpush1.bf16.msra.mxu0 0
      %380 = vmatprep.subr.bf16.mxu0 0
      %381 = vmatpush1.bf16.msra.mxu0 0
      %382 = vmatprep.mubr.bf16.mxu0 0
      %383 = vmatmul.mubr.bf16.gmra.mrb[0].mxu0 %v345
      %v384 = vpop.f32.mrb[0].mxu0
      %v385 = vadd.f32 0.0, %v384
      %v386 = vpop.f32.mrb[0].mxu0
      %v387 = vpop.f32.mrb[0].mxu0
      %v388 = vpop.f32.mrb[0].mxu0
      %389 = vdwg.mxu0
      %390 = vrot.lane.b32.xlu0 %v279, 112
      %v391 = vpop.permute.xlu0 %390
      %392 = vrot.lane.b32.xlu0 %v166, 80
      %v393 = vpop.permute.xlu0 %392
      %v395 = vsel %vm169, %v391, 0
      %v398 = vsel %vm169, %v393, 0
      %400 = vmatprep.subr.bf16.mxu0 0
      %401 = vmatpush1.bf16.xpose.msra.mxu0 %v398
      %402 = vmatprep.subr.bf16.mxu0 0
      %403 = vmatpush1.bf16.xpose.msra.mxu0 0
      %404 = vmatprep.subr.bf16.mxu0 0
      %405 = vmatpush1.bf16.xpose.msra.mxu0 0
      %406 = vmatprep.subr.bf16.mxu0 0
      %407 = vmatpush1.bf16.xpose.msra.mxu0 0
      %408 = vmatprep.subr.bf16.mxu0 0
      %409 = vmatpush1.bf16.xpose.msra.mxu0 0
      %410 = vmatprep.subr.bf16.mxu0 0
      %411 = vmatpush1.bf16.xpose.msra.mxu0 0
      %412 = vmatprep.subr.bf16.mxu0 0
      %413 = vmatpush1.bf16.xpose.msra.mxu0 0
      %414 = vmatprep.subr.bf16.mxu0 0
      %415 = vmatpush1.bf16.xpose.msra.mxu0 0
      %416 = vmatprep.subr.bf16.mxu0 0
      %417 = vmatpush1.bf16.xpose.msra.mxu0 0
      %418 = vmatprep.subr.bf16.mxu0 0
      %419 = vmatpush1.bf16.xpose.msra.mxu0 0
      %420 = vmatprep.subr.bf16.mxu0 0
      %421 = vmatpush1.bf16.xpose.msra.mxu0 0
      %422 = vmatprep.subr.bf16.mxu0 0
      %423 = vmatpush1.bf16.xpose.msra.mxu0 0
      %424 = vmatprep.subr.bf16.mxu0 0
      %425 = vmatpush1.bf16.xpose.msra.mxu0 0
      %426 = vmatprep.subr.bf16.mxu0 0
      %427 = vmatpush1.bf16.xpose.msra.mxu0 0
      %428 = vmatprep.subr.bf16.mxu0 0
      %429 = vmatpush1.bf16.xpose.msra.mxu0 0
      %430 = vmatprep.subr.bf16.mxu0 0
      %431 = vmatpush1.bf16.xpose.msra.mxu0 0
      %432 = vmatprep.mubr.bf16.mxu0 0
      %433 = vmatmul.mubr.bf16.gmra.mrb[0].mxu0 %v395
      %v434 = vpop.f32.mrb[0].mxu0
      %v435 = vadd.f32 %v162, %v434
      %v436 = vpop.f32.mrb[0].mxu0
      %v437 = vpop.f32.mrb[0].mxu0
      %v438 = vpop.f32.mrb[0].mxu0
      %439 = vdwg.mxu0
      %v440 = vsel %vm169, %v435, -inf
      %441 = vmax.xlane.f32.xlu0 %v440
      %v442 = vpop.xlane.xlu0 %441
      %v443 = vsub.f32 %v435, %v442
      %v444 = vmul.f32 %v443, 1.442695
      %v445 = vpow.pop %v444
      %v446 = vsel %vm169, %v445, 0.0
      %447 = vadd.xlane.f32.xlu0 %v446
      %v448 = vpop.xlane.xlu0 %447
      %v449 = vrcp.pop %v448
      %v450 = vmul.f32 %v445, %v449
      %v451 = vpack.c.bf16 %v450, %v450
      %452 = vrot.lane.b32.xlu0 %v166, 48
      %v453 = vpop.permute.xlu0 %452
      %v455 = vsel %vm169, %v451, 0
      %v458 = vsel %vm233, %v453, 0
      %460 = vmatprep.subr.bf16.mxu0 0
      %461 = vmatpush1.bf16.msra.mxu0 %v458
      %462 = vmatprep.subr.bf16.mxu0 0
      %463 = vmatpush1.bf16.msra.mxu0 0
      %464 = vmatprep.subr.bf16.mxu0 0
      %465 = vmatpush1.bf16.msra.mxu0 0
      %466 = vmatprep.subr.bf16.mxu0 0
      %467 = vmatpush1.bf16.msra.mxu0 0
      %468 = vmatprep.subr.bf16.mxu0 0
      %469 = vmatpush1.bf16.msra.mxu0 0
      %470 = vmatprep.subr.bf16.mxu0 0
      %471 = vmatpush1.bf16.msra.mxu0 0
      %472 = vmatprep.subr.bf16.mxu0 0
      %473 = vmatpush1.bf16.msra.mxu0 0
      %474 = vmatprep.subr.bf16.mxu0 0
      %475 = vmatpush1.bf16.msra.mxu0 0
      %476 = vmatprep.subr.bf16.mxu0 0
      %477 = vmatpush1.bf16.msra.mxu0 0
      %478 = vmatprep.subr.bf16.mxu0 0
      %479 = vmatpush1.bf16.msra.mxu0 0
      %480 = vmatprep.subr.bf16.mxu0 0
      %481 = vmatpush1.bf16.msra.mxu0 0
      %482 = vmatprep.subr.bf16.mxu0 0
      %483 = vmatpush1.bf16.msra.mxu0 0
      %484 = vmatprep.subr.bf16.mxu0 0
      %485 = vmatpush1.bf16.msra.mxu0 0
      %486 = vmatprep.subr.bf16.mxu0 0
      %487 = vmatpush1.bf16.msra.mxu0 0
      %488 = vmatprep.subr.bf16.mxu0 0
      %489 = vmatpush1.bf16.msra.mxu0 0
      %490 = vmatprep.subr.bf16.mxu0 0
      %491 = vmatpush1.bf16.msra.mxu0 0
      %492 = vmatprep.mubr.bf16.mxu0 0
      %493 = vmatmul.mubr.bf16.gmra.mrb[0].mxu0 %v455
      %v494 = vpop.f32.mrb[0].mxu0
      %v495 = vadd.f32 0.0, %v494
      %v496 = vpop.f32.mrb[0].mxu0
      %v497 = vpop.f32.mrb[0].mxu0
      %v498 = vpop.f32.mrb[0].mxu0
      %499 = vdwg.mxu0
      %500 = vrot.lane.b32.xlu0 %v279, 104
      %v501 = vpop.permute.xlu0 %500
      %502 = vrot.lane.b32.xlu0 %v166, 72
      %v503 = vpop.permute.xlu0 %502
      %v505 = vsel %vm169, %v501, 0
      %v508 = vsel %vm169, %v503, 0
      %510 = vmatprep.subr.bf16.mxu0 0
      %511 = vmatpush1.bf16.xpose.msra.mxu0 %v508
      %512 = vmatprep.subr.bf16.mxu0 0
      %513 = vmatpush1.bf16.xpose.msra.mxu0 0
      %514 = vmatprep.subr.bf16.mxu0 0
      %515 = vmatpush1.bf16.xpose.msra.mxu0 0
      %516 = vmatprep.subr.bf16.mxu0 0
      %517 = vmatpush1.bf16.xpose.msra.mxu0 0
      %518 = vmatprep.subr.bf16.mxu0 0
      %519 = vmatpush1.bf16.xpose.msra.mxu0 0
      %520 = vmatprep.subr.bf16.mxu0 0
      %521 = vmatpush1.bf16.xpose.msra.mxu0 0
      %522 = vmatprep.subr.bf16.mxu0 0
      %523 = vmatpush1.bf16.xpose.msra.mxu0 0
      %524 = vmatprep.subr.bf16.mxu0 0
      %525 = vmatpush1.bf16.xpose.msra.mxu0 0
      %526 = vmatprep.subr.bf16.mxu0 0
      %527 = vmatpush1.bf16.xpose.msra.mxu0 0
      %528 = vmatprep.subr.bf16.mxu0 0
      %529 = vmatpush1.bf16.xpose.msra.mxu0 0
      %530 = vmatprep.subr.bf16.mxu0 0
      %531 = vmatpush1.bf16.xpose.msra.mxu0 0
      %532 = vmatprep.subr.bf16.mxu0 0
      %533 = vmatpush1.bf16.xpose.msra.mxu0 0
      %534 = vmatprep.subr.bf16.mxu0 0
      %535 = vmatpush1.bf16.xpose.msra.mxu0 0
      %536 = vmatprep.subr.bf16.mxu0 0
      %537 = vmatpush1.bf16.xpose.msra.mxu0 0
      %538 = vmatprep.subr.bf16.mxu0 0
      %539 = vmatpush1.bf16.xpose.msra.mxu0 0
      %540 = vmatprep.subr.bf16.mxu0 0
      %541 = vmatpush1.bf16.xpose.msra.mxu0 0
      %542 = vmatprep.mubr.bf16.mxu0 0
      %543 = vmatmul.mubr.bf16.gmra.mrb[0].mxu0 %v505
      %v544 = vpop.f32.mrb[0].mxu0
      %v545 = vadd.f32 %v162, %v544
      %v546 = vpop.f32.mrb[0].mxu0
      %v547 = vpop.f32.mrb[0].mxu0
      %v548 = vpop.f32.mrb[0].mxu0
      %549 = vdwg.mxu0
      %v550 = vsel %vm169, %v545, -inf
      %551 = vmax.xlane.f32.xlu0 %v550
      %v552 = vpop.xlane.xlu0 %551
      %v553 = vsub.f32 %v545, %v552
      %v554 = vmul.f32 %v553, 1.442695
      %v555 = vpow.pop %v554
      %v556 = vsel %vm169, %v555, 0.0
      %557 = vadd.xlane.f32.xlu0 %v556
      %v558 = vpop.xlane.xlu0 %557
      %v559 = vrcp.pop %v558
      %v560 = vmul.f32 %v555, %v559
      %v561 = vpack.c.bf16 %v560, %v560
      %562 = vrot.lane.b32.xlu0 %v166, 40
      %v563 = vpop.permute.xlu0 %562
      %v565 = vsel %vm169, %v561, 0
      %v568 = vsel %vm233, %v563, 0
      %570 = vmatprep.subr.bf16.mxu0 0
      %571 = vmatpush1.bf16.msra.mxu0 %v568
      %572 = vmatprep.subr.bf16.mxu0 0
      %573 = vmatpush1.bf16.msra.mxu0 0
      %574 = vmatprep.subr.bf16.mxu0 0
      %575 = vmatpush1.bf16.msra.mxu0 0
      %576 = vmatprep.subr.bf16.mxu0 0
      %577 = vmatpush1.bf16.msra.mxu0 0
      %578 = vmatprep.subr.bf16.mxu0 0
      %579 = vmatpush1.bf16.msra.mxu0 0
      %580 = vmatprep.subr.bf16.mxu0 0
      %581 = vmatpush1.bf16.msra.mxu0 0
      %582 = vmatprep.subr.bf16.mxu0 0
      %583 = vmatpush1.bf16.msra.mxu0 0
      %584 = vmatprep.subr.bf16.mxu0 0
      %585 = vmatpush1.bf16.msra.mxu0 0
      %586 = vmatprep.subr.bf16.mxu0 0
      %587 = vmatpush1.bf16.msra.mxu0 0
      %588 = vmatprep.subr.bf16.mxu0 0
      %589 = vmatpush1.bf16.msra.mxu0 0
      %590 = vmatprep.subr.bf16.mxu0 0
      %591 = vmatpush1.bf16.msra.mxu0 0
      %592 = vmatprep.subr.bf16.mxu0 0
      %593 = vmatpush1.bf16.msra.mxu0 0
      %594 = vmatprep.subr.bf16.mxu0 0
      %595 = vmatpush1.bf16.msra.mxu0 0
      %596 = vmatprep.subr.bf16.mxu0 0
      %597 = vmatpush1.bf16.msra.mxu0 0
      %598 = vmatprep.subr.bf16.mxu0 0
      %599 = vmatpush1.bf16.msra.mxu0 0
      %600 = vmatprep.subr.bf16.mxu0 0
      %601 = vmatpush1.bf16.msra.mxu0 0
      %602 = vmatprep.mubr.bf16.mxu0 0
      %603 = vmatmul.mubr.bf16.gmra.mrb[0].mxu0 %v565
      %v604 = vpop.f32.mrb[0].mxu0
      %v605 = vadd.f32 0.0, %v604
      %v606 = vpop.f32.mrb[0].mxu0
      %v607 = vpop.f32.mrb[0].mxu0
      %v608 = vpop.f32.mrb[0].mxu0
      %609 = vdwg.mxu0
      %611 = vrot.lane.b32.xlu0 %v385, 8
      %v612 = vpop.permute.xlu0 %611
      %615 = vrot.lane.b32.xlu0 %v495, 16
      %v616 = vpop.permute.xlu0 %615
      %619 = vrot.lane.b32.xlu0 %v605, 24
      %v620 = vpop.permute.xlu0 %619
      %v622 = vsel %vm169, %v272, %v612
      %vm623 = vcmask 130048
      %v624 = vsel %vm623, %v622, %v616
      %vm625 = vcmask 195584
      %v626 = vsel %vm625, %v624, %v620
      %v627 = vpack.c.bf16 %v626, %v626
      %vm628 = vcmask 257024
      %629 = vst.msk [vmem:[%s152] sm:$0xf] %vm628, %v627
      %p630 = scmp.lt.s32.totalorder %s13, 1
      %s631 = scalar_select %p630, %s13, 1
      %s632 = smul.addr %s631, 4
      %s633 = scalar_lea.vmem %s2, %s632
      // Predicated region
      $region29: #{bert_embedding_forward.14} parent=27 // pred_check
        %p634 = pneg %p83
      $region30: #{bert_embedding_forward.14} parent=27 // pred_check_branch
        %636 = sbr.rel (%p634) target = $region32
      $region31: #{bert_embedding_forward.14} parent=27 // pred_region
        _
      $region32: #{bert_embedding_forward.14} parent=27 // pred_fallthru
        _
    $region28: #{bert_embedding_forward.14} parent=5 // pred_fallthru
      _
    %p637 = scmp.le.s32.totalorder 2, %s8
    // Predicated region
    $region33: #{bert_embedding_forward.14} parent=5 // pred_check
      %p638 = pneg %p637
    $region34: #{bert_embedding_forward.14} parent=5 // pred_check_branch
      %640 = sbr.rel (%p638) target = $region36
    $region35: #{bert_embedding_forward.14} parent=5 // pred_region
      %s641 = ssub.s32 %s8, 2
      // Predicated region
      $region37: #{bert_embedding_forward.14} parent=35 // pred_check
        %p642 = pneg %p89
      $region38: #{bert_embedding_forward.14} parent=35 // pred_check_branch
        %644 = sbr.rel (%p642) target = $region40
      $region39: #{bert_embedding_forward.14} parent=35 // pred_region
        %p645 = scmp.lt.s32.totalorder %s14, 1
        %s646 = scalar_select %p645, %s14, 1
        %s647 = smul.addr %s646, 4
        %s648 = scalar_lea.vmem %s2, %s647
      $region40: #{bert_embedding_forward.14} parent=35 // pred_fallthru
        _
    $region36: #{bert_embedding_forward.14} parent=5 // pred_fallthru
      _
  $region6: #{bert_embedding_forward.14} parent=0 // loop_footer
    %s12 = sadd.s32 1, %s8
  $region7: #{bert_embedding_forward.14} parent=0 // loop_footer_branch
    %7 = sbr.rel target = $region3
  $region8: #{bert_embedding_forward.14} parent=0 // loop_exit
    _

// kernel: bert_embedding_forward.16
$region0: #{bert_embedding_forward.16}
  #allocation0 [shape = 'u32[]', space=smem, size = 0x4, offset = 0x4, fixed_abs, tag = 'smem constant byte address 0x4 - core index']
  #allocation1 [shape = 'u32[144,128]{1,0:T(1,128)}', space=vmem, size = 0x12000, scoped, tag = 'internal scratch']
  #allocation2 [shape = 'f32[16,64]{1,0:T(8,128)}', space=vmem, size = 0x2000, scoped, tag = 'scratch operand']
  %s0 = inlined_call_operand.vmem [shape: bf16[16,32], index: 0, kind: input, shape index: {}]
  %s1 = inlined_call_operand.vmem [shape: bf16[32,64], index: 1, kind: input, shape index: {}]
  %s2 = inlined_call_operand.vmem [shape: f32[1,64], index: 2, kind: input, shape index: {}]
  %s3 = inlined_call_operand.vmem [shape: bf16[16,64], index: 3, kind: output, shape index: {}]
  %s4 = sld [smem:[#allocation0]]
  $region30: #{bert_embedding_forward.16} parent=0
    _
  %s6 = ssub.s32 1, %s4
  %s7 = scalar_select 0, %s6, %s4
  // Predicated region
  $region2: #{bert_embedding_forward.16} parent=0 // pred_check
    _
  $region3: #{bert_embedding_forward.16} parent=0 // pred_check_branch
    %9 = sbr.rel (0) target = $region5
  $region4: #{bert_embedding_forward.16} parent=0 // pred_region
    _
  $region5: #{bert_embedding_forward.16} parent=0 // pred_fallthru
    _
  // Predicated region
  $region6: #{bert_embedding_forward.16} parent=0 // pred_check
    _
  $region7: #{bert_embedding_forward.16} parent=0 // pred_check_branch
    %11 = sbr.rel (0) target = $region9
  $region8: #{bert_embedding_forward.16} parent=0 // pred_region
    _
  $region9: #{bert_embedding_forward.16} parent=0 // pred_fallthru
    _
  // Predicated region
  $region10: #{bert_embedding_forward.16} parent=0 // pred_check
    _
  $region11: #{bert_embedding_forward.16} parent=0 // pred_check_branch
    %13 = sbr.rel (0) target = $region13
  $region12: #{bert_embedding_forward.16} parent=0 // pred_region
    _
  $region13: #{bert_embedding_forward.16} parent=0 // pred_fallthru
    _
  %p15 = scmp.eq.s32.totalorder 0, 0
  // Predicated region
  $region14: #{bert_embedding_forward.16} parent=0 // pred_check
    %p16 = pneg %p15
  $region15: #{bert_embedding_forward.16} parent=0 // pred_check_branch
    %18 = sbr.rel (%p16) target = $region17
  $region16: #{bert_embedding_forward.16} parent=0 // pred_region
    %vm19 = vcmask 523264
    %20 = vst.msk [vmem:[#allocation2] sm:$0xff] %vm19, 0.0
    %21 = vst.msk [vmem:[#allocation2 + $0x8] sm:$0xff] %vm19, 0.0
  $region17: #{bert_embedding_forward.16} parent=0 // pred_fallthru
    _
  %v22 = vld [vmem:[#allocation2] sm:$0xff]
  %v23 = vld [vmem:[#allocation2 + $0x8] sm:$0xff]
  %v24 = vld [vmem:[%s0] sm:$0xf]
  %v25 = vld [vmem:[%s0 + $0x4] sm:$0xf]
  %v26 = vld [vmem:[%s1] sm:$0xf]
  %v27 = vld [vmem:[%s1 + $0x4] sm:$0xf]
  %v28 = vld [vmem:[%s1 + $0x8] sm:$0xf]
  %v29 = vld [vmem:[%s1 + $0xc] sm:$0xf]
  %v32 = vunpack.c.l.b16 %v24
  %v33 = vunpack.c.l.b16 %v25
  %v34 = vpack.c.b16 %v33, %v32
  %v39 = vunpack.c.l.b16 %v26
  %v40 = vunpack.c.l.b16 %v27
  %v41 = vunpack.c.l.b16 %v28
  %v42 = vunpack.c.l.b16 %v29
  %v43 = vpack.c.b16 %v40, %v39
  %v44 = vpack.c.b16 %v42, %v41
  %vm47 = vcmask 261120
  %v49 = vsel %vm47, %v34, 0
  %51 = vmatprep.subr.bf16.mxu0 0
  %52 = vmatpush1.bf16.msra.mxu0 %v43
  %53 = vmatprep.subr.bf16.mxu0 0
  %54 = vmatpush1.bf16.msra.mxu0 %v44
  %55 = vmatprep.subr.bf16.mxu0 0
  %56 = vmatpush1.bf16.msra.mxu0 0
  %57 = vmatprep.subr.bf16.mxu0 0
  %58 = vmatpush1.bf16.msra.mxu0 0
  %59 = vmatprep.subr.bf16.mxu0 0
  %60 = vmatpush1.bf16.msra.mxu0 0
  %61 = vmatprep.subr.bf16.mxu0 0
  %62 = vmatpush1.bf16.msra.mxu0 0
  %63 = vmatprep.subr.bf16.mxu0 0
  %64 = vmatpush1.bf16.msra.mxu0 0
  %65 = vmatprep.subr.bf16.mxu0 0
  %66 = vmatpush1.bf16.msra.mxu0 0
  %67 = vmatprep.subr.bf16.mxu0 0
  %68 = vmatpush1.bf16.msra.mxu0 0
  %69 = vmatprep.subr.bf16.mxu0 0
  %70 = vmatpush1.bf16.msra.mxu0 0
  %71 = vmatprep.subr.bf16.mxu0 0
  %72 = vmatpush1.bf16.msra.mxu0 0
  %73 = vmatprep.subr.bf16.mxu0 0
  %74 = vmatpush1.bf16.msra.mxu0 0
  %75 = vmatprep.subr.bf16.mxu0 0
  %76 = vmatpush1.bf16.msra.mxu0 0
  %77 = vmatprep.subr.bf16.mxu0 0
  %78 = vmatpush1.bf16.msra.mxu0 0
  %79 = vmatprep.subr.bf16.mxu0 0
  %80 = vmatpush1.bf16.msra.mxu0 0
  %81 = vmatprep.subr.bf16.mxu0 0
  %82 = vmatpush1.bf16.msra.mxu0 0
  %83 = vmatprep.mubr.bf16.mxu0 0
  %84 = vmatmul.mubr.bf16.gmra.mrb[0].mxu0 %v49
  %v85 = vpop.f32.mrb[0].mxu0
  %v86 = vadd.f32 0.0, %v85
  %v87 = vpop.f32.mrb[0].mxu0
  %v88 = vpop.f32.mrb[0].mxu0
  %v89 = vadd.f32 0.0, %v88
  %v90 = vpop.f32.mrb[0].mxu0
  %91 = vdwg.mxu0
  %v92 = vadd.f32 %v22, %v86
  %v93 = vadd.f32 %v23, %v89
  %vm94 = vcmask 523264
  %95 = vst.msk [vmem:[#allocation2] sm:$0xff] %vm94, %v92
  %96 = vst.msk [vmem:[#allocation2 + $0x8] sm:$0xff] %vm94, %v93
  // Predicated region
  $region18: #{bert_embedding_forward.16} parent=0 // pred_check
    %p97 = pneg %p15
  $region19: #{bert_embedding_forward.16} parent=0 // pred_check_branch
    %99 = sbr.rel (%p97) target = $region21
  $region20: #{bert_embedding_forward.16} parent=0 // pred_region
    %v100 = vld [vmem:[#allocation2] sm:$0xff]
    %v101 = vld [vmem:[#allocation2 + $0x8] sm:$0xff]
    %v102 = vld [vmem:[%s2] sm:$0x1]
    %v104 = vlaneseq
    %v105 = vshrl.u32 %v104, 7
    %v106 = vsub.s32 0, %v105
    %v107 = vrot.slane %v102, %v106
    %v109 = vadd.f32 %v100, %v107
    %v110 = vadd.f32 %v101, %v107
    %v111 = vmul.f32 %v109, 0.5
    %v112 = vmul.f32 %v110, 0.5
    %v113 = vmul.f32 %v109, 0.044715
    %v114 = vmul.f32 %v110, 0.044715
    %v115 = vmul.f32 %v113, %v109
    %v116 = vmul.f32 %v114, %v110
    %v117 = vmul.f32 %v115, %v109
    %v118 = vmul.f32 %v116, %v110
    %v119 = vadd.f32 %v109, %v117
    %v120 = vadd.f32 %v110, %v118
    %v121 = vmul.f32 %v119, 0.7978846
    %v122 = vmul.f32 %v120, 0.7978846
    %v123 = vtanh.pop %v121
    %v124 = vtanh.pop %v122
    %v125 = vadd.f32 %v123, 1.0
    %v126 = vadd.f32 %v124, 1.0
    %v127 = vmul.f32 %v111, %v125
    %v128 = vmul.f32 %v112, %v126
    %v129 = vpack.c.bf16 %v128, %v127
    %v131 = vunpack.c.l.b16 %v129
    %v132 = vunpack.c.h.b16 %v129
    %v133 = vpack.c.b16 %v131, %v131
    %v134 = vpack.c.b16 %v132, %v132
    %vm137 = vcmask 519168
    %138 = vst.msk [vmem:[%s3] sm:$0xf] %vm137, %v133
    %139 = vst.msk [vmem:[%s3 + $0x4] sm:$0xf] %vm137, %v134
  $region21: #{bert_embedding_forward.16} parent=0 // pred_fallthru
    _
  // Predicated region
  $region22: #{bert_embedding_forward.16} parent=0 // pred_check
    _
  $region23: #{bert_embedding_forward.16} parent=0 // pred_check_branch
    %141 = sbr.rel (0) target = $region25
  $region24: #{bert_embedding_forward.16} parent=0 // pred_region
    _
  $region25: #{bert_embedding_forward.16} parent=0 // pred_fallthru
    _
  // Predicated region
  $region26: #{bert_embedding_forward.16} parent=0 // pred_check
    _
  $region27: #{bert_embedding_forward.16} parent=0 // pred_check_branch
    %143 = sbr.rel (0) target = $region29
  $region28: #{bert_embedding_forward.16} parent=0 // pred_region
    _
  $region29: #{bert_embedding_forward.16} parent=0 // pred_fallthru
    _

// kernel: bert_embedding_forward.17
$region0: #{bert_embedding_forward.17}
  #allocation0 [shape = 'u32[]', space=smem, size = 0x4, offset = 0x4, fixed_abs, tag = 'smem constant byte address 0x4 - core index']
  #allocation1 [shape = 'u32[144,128]{1,0:T(1,128)}', space=vmem, size = 0x12000, scoped, tag = 'internal scratch']
  #allocation2 [shape = 'f32[16,32]{1,0:T(8,128)}', space=vmem, size = 0x2000, scoped, tag = 'scratch operand']
  %s0 = inlined_call_operand.vmem [shape: bf16[16,64], index: 0, kind: input, shape index: {}]
  %s1 = inlined_call_operand.vmem [shape: bf16[64,32], index: 1, kind: input, shape index: {}]
  %s2 = inlined_call_operand.vmem [shape: f32[1,32], index: 2, kind: input, shape index: {}]
  %s3 = inlined_call_operand.vmem [shape: bf16[16,32], index: 3, kind: input, shape index: {}]
  %s4 = inlined_call_operand.vmem [shape: f32[1,32], index: 4, kind: input, shape index: {}]
  %s5 = inlined_call_operand.vmem [shape: f32[1,32], index: 5, kind: input, shape index: {}]
  %s6 = inlined_call_operand.vmem [shape: bf16[16,32], index: 6, kind: output, shape index: {}]
  %s7 = sld [smem:[#allocation0]]
  $region42: #{bert_embedding_forward.17} parent=0
    _
  %s9 = ssub.s32 1, %s7
  %s10 = scalar_select 0, %s9, %s7
  // Predicated region
  $region2: #{bert_embedding_forward.17} parent=0 // pred_check
    _
  $region3: #{bert_embedding_forward.17} parent=0 // pred_check_branch
    %12 = sbr.rel (0) target = $region5
  $region4: #{bert_embedding_forward.17} parent=0 // pred_region
    _
  $region5: #{bert_embedding_forward.17} parent=0 // pred_fallthru
    _
  // Predicated region
  $region6: #{bert_embedding_forward.17} parent=0 // pred_check
    _
  $region7: #{bert_embedding_forward.17} parent=0 // pred_check_branch
    %14 = sbr.rel (0) target = $region9
  $region8: #{bert_embedding_forward.17} parent=0 // pred_region
    _
  $region9: #{bert_embedding_forward.17} parent=0 // pred_fallthru
    _
  // Predicated region
  $region10: #{bert_embedding_forward.17} parent=0 // pred_check
    _
  $region11: #{bert_embedding_forward.17} parent=0 // pred_check_branch
    %16 = sbr.rel (0) target = $region13
  $region12: #{bert_embedding_forward.17} parent=0 // pred_region
    _
  $region13: #{bert_embedding_forward.17} parent=0 // pred_fallthru
    _
  // Predicated region
  $region14: #{bert_embedding_forward.17} parent=0 // pred_check
    _
  $region15: #{bert_embedding_forward.17} parent=0 // pred_check_branch
    %18 = sbr.rel (0) target = $region17
  $region16: #{bert_embedding_forward.17} parent=0 // pred_region
    _
  $region17: #{bert_embedding_forward.17} parent=0 // pred_fallthru
    _
  // Predicated region
  $region18: #{bert_embedding_forward.17} parent=0 // pred_check
    _
  $region19: #{bert_embedding_forward.17} parent=0 // pred_check_branch
    %20 = sbr.rel (0) target = $region21
  $region20: #{bert_embedding_forward.17} parent=0 // pred_region
    _
  $region21: #{bert_embedding_forward.17} parent=0 // pred_fallthru
    _
  // Predicated region
  $region22: #{bert_embedding_forward.17} parent=0 // pred_check
    _
  $region23: #{bert_embedding_forward.17} parent=0 // pred_check_branch
    %22 = sbr.rel (0) target = $region25
  $region24: #{bert_embedding_forward.17} parent=0 // pred_region
    _
  $region25: #{bert_embedding_forward.17} parent=0 // pred_fallthru
    _
  %p24 = scmp.eq.s32.totalorder 0, 0
  // Predicated region
  $region26: #{bert_embedding_forward.17} parent=0 // pred_check
    %p25 = pneg %p24
  $region27: #{bert_embedding_forward.17} parent=0 // pred_check_branch
    %27 = sbr.rel (%p25) target = $region29
  $region28: #{bert_embedding_forward.17} parent=0 // pred_region
    %vm28 = vcmask 261120
    %29 = vst.msk [vmem:[#allocation2] sm:$0xff] %vm28, 0.0
    %30 = vst.msk [vmem:[#allocation2 + $0x8] sm:$0xff] %vm28, 0.0
  $region29: #{bert_embedding_forward.17} parent=0 // pred_fallthru
    _
  %v31 = vld [vmem:[#allocation2] sm:$0xff]
  %v32 = vld [vmem:[#allocation2 + $0x8] sm:$0xff]
  %v33 = vld [vmem:[%s0] sm:$0xf]
  %v34 = vld [vmem:[%s0 + $0x4] sm:$0xf]
  %v35 = vld [vmem:[%s1] sm:$0xf]
  %v36 = vld [vmem:[%s1 + $0x4] sm:$0xf]
  %v37 = vld [vmem:[%s1 + $0x8] sm:$0xf]
  %v38 = vld [vmem:[%s1 + $0xc] sm:$0xf]
  %v39 = vld [vmem:[%s1 + $0x10] sm:$0xf]
  %v40 = vld [vmem:[%s1 + $0x14] sm:$0xf]
  %v41 = vld [vmem:[%s1 + $0x18] sm:$0xf]
  %v42 = vld [vmem:[%s1 + $0x1c] sm:$0xf]
  %v45 = vunpack.c.l.b16 %v33
  %v46 = vunpack.c.l.b16 %v34
  %v47 = vpack.c.b16 %v46, %v45
  %v56 = vunpack.c.l.b16 %v35
  %v57 = vunpack.c.l.b16 %v36
  %v58 = vunpack.c.l.b16 %v37
  %v59 = vunpack.c.l.b16 %v38
  %v60 = vunpack.c.l.b16 %v39
  %v61 = vunpack.c.l.b16 %v40
  %v62 = vunpack.c.l.b16 %v41
  %v63 = vunpack.c.l.b16 %v42
  %v64 = vpack.c.b16 %v57, %v56
  %v65 = vpack.c.b16 %v59, %v58
  %v66 = vpack.c.b16 %v61, %v60
  %v67 = vpack.c.b16 %v63, %v62
  %vm72 = vcmask 523264
  %v74 = vsel %vm72, %v47, 0
  %76 = vmatprep.subr.bf16.mxu0 0
  %77 = vmatpush1.bf16.msra.mxu0 %v64
  %78 = vmatprep.subr.bf16.mxu0 0
  %79 = vmatpush1.bf16.msra.mxu0 %v65
  %80 = vmatprep.subr.bf16.mxu0 0
  %81 = vmatpush1.bf16.msra.mxu0 %v66
  %82 = vmatprep.subr.bf16.mxu0 0
  %83 = vmatpush1.bf16.msra.mxu0 %v67
  %84 = vmatprep.subr.bf16.mxu0 0
  %85 = vmatpush1.bf16.msra.mxu0 0
  %86 = vmatprep.subr.bf16.mxu0 0
  %87 = vmatpush1.bf16.msra.mxu0 0
  %88 = vmatprep.subr.bf16.mxu0 0
  %89 = vmatpush1.bf16.msra.mxu0 0
  %90 = vmatprep.subr.bf16.mxu0 0
  %91 = vmatpush1.bf16.msra.mxu0 0
  %92 = vmatprep.subr.bf16.mxu0 0
  %93 = vmatpush1.bf16.msra.mxu0 0
  %94 = vmatprep.subr.bf16.mxu0 0
  %95 = vmatpush1.bf16.msra.mxu0 0
  %96 = vmatprep.subr.bf16.mxu0 0
  %97 = vmatpush1.bf16.msra.mxu0 0
  %98 = vmatprep.subr.bf16.mxu0 0
  %99 = vmatpush1.bf16.msra.mxu0 0
  %100 = vmatprep.subr.bf16.mxu0 0
  %101 = vmatpush1.bf16.msra.mxu0 0
  %102 = vmatprep.subr.bf16.mxu0 0
  %103 = vmatpush1.bf16.msra.mxu0 0
  %104 = vmatprep.subr.bf16.mxu0 0
  %105 = vmatpush1.bf16.msra.mxu0 0
  %106 = vmatprep.subr.bf16.mxu0 0
  %107 = vmatpush1.bf16.msra.mxu0 0
  %108 = vmatprep.mubr.bf16.mxu0 0
  %109 = vmatmul.mubr.bf16.gmra.mrb[0].mxu0 %v74
  %v110 = vpop.f32.mrb[0].mxu0
  %v111 = vadd.f32 0.0, %v110
  %v112 = vpop.f32.mrb[0].mxu0
  %v113 = vpop.f32.mrb[0].mxu0
  %v114 = vadd.f32 0.0, %v113
  %v115 = vpop.f32.mrb[0].mxu0
  %116 = vdwg.mxu0
  %v117 = vadd.f32 %v31, %v111
  %v118 = vadd.f32 %v32, %v114
  %vm119 = vcmask 261120
  %120 = vst.msk [vmem:[#allocation2] sm:$0xff] %vm119, %v117
  %121 = vst.msk [vmem:[#allocation2 + $0x8] sm:$0xff] %vm119, %v118
  // Predicated region
  $region30: #{bert_embedding_forward.17} parent=0 // pred_check
    %p122 = pneg %p24
  $region31: #{bert_embedding_forward.17} parent=0 // pred_check_branch
    %124 = sbr.rel (%p122) target = $region33
  $region32: #{bert_embedding_forward.17} parent=0 // pred_region
    %v125 = vld [vmem:[#allocation2] sm:$0xff]
    %v126 = vld [vmem:[#allocation2 + $0x8] sm:$0xff]
    %v127 = vld [vmem:[%s2] sm:$0x1]
    %v129 = vlaneseq
    %v130 = vshrl.u32 %v129, 7
    %v131 = vsub.s32 0, %v130
    %v132 = vrot.slane %v127, %v131
    %v134 = vadd.f32 %v125, %v132
    %v135 = vadd.f32 %v126, %v132
    %v136 = vld [vmem:[%s3] sm:$0xf]
    %v137 = vld [vmem:[%s3 + $0x4] sm:$0xf]
    %v138 = vunpack.c.l.bf16 %v136
    %v139 = vunpack.c.l.bf16 %v137
    %v140 = vadd.f32 %v134, %v138
    %v141 = vadd.f32 %v135, %v139
    %v142 = vld [vmem:[%s4] sm:$0x1]
    %v143 = vld [vmem:[%s5] sm:$0x1]
    %v144 = vsel %vm119, %v140, 0.0
    %145 = vadd.xlane.f32.xlu0 %v144
    %v146 = vpop.xlane.xlu0 %145
    %v147 = vsel %vm119, %v141, 0.0
    %148 = vadd.xlane.f32.xlu0 %v147
    %v149 = vpop.xlane.xlu0 %148
    %v150 = vrcp.pop 32.0
    %v151 = vmul.f32 %v146, %v150
    %v152 = vmul.f32 %v149, %v150
    %v153 = vsub.f32 %v140, %v151
    %v154 = vsub.f32 %v141, %v152
    %v155 = vmul.f32 %v153, %v153
    %v156 = vmul.f32 %v154, %v154
    %v157 = vsel %vm119, %v155, 0.0
    %158 = vadd.xlane.f32.xlu0 %v157
    %v159 = vpop.xlane.xlu0 %158
    %v160 = vsel %vm119, %v156, 0.0
    %161 = vadd.xlane.f32.xlu0 %v160
    %v162 = vpop.xlane.xlu0 %161
    %v163 = vmul.f32 %v159, %v150
    %v164 = vmul.f32 %v162, %v150
    %v165 = vadd.f32 %v163, 1e-12
    %v166 = vadd.f32 %v164, 1e-12
    %v167 = vrsqrt.pop %v165
    %v168 = vrsqrt.pop %v166
    %v169 = vmul.f32 %v153, %v167
    %v170 = vmul.f32 %v154, %v168
    %v172 = vlaneseq
    %v173 = vshrl.u32 %v172, 7
    %v174 = vsub.s32 0, %v173
    %v175 = vrot.slane %v142, %v174
    %v177 = vmul.f32 %v169, %v175
    %v178 = vmul.f32 %v170, %v175
    %v180 = vlaneseq
    %v181 = vshrl.u32 %v180, 7
    %v182 = vsub.s32 0, %v181
    %v183 = vrot.slane %v143, %v182
    %v185 = vadd.f32 %v177, %v183
    %v186 = vadd.f32 %v178, %v183
    %v187 = vpack.c.bf16 %v186, %v185
    %v189 = vunpack.c.l.b16 %v187
    %v190 = vunpack.c.h.b16 %v187
    %v191 = vpack.c.b16 %v189, %v189
    %v192 = vpack.c.b16 %v190, %v190
    %vm195 = vcmask 257024
    %196 = vst.msk [vmem:[%s6] sm:$0xf] %vm195, %v191
    %197 = vst.msk [vmem:[%s6 + $0x4] sm:$0xf] %vm195, %v192
  $region33: #{bert_embedding_forward.17} parent=0 // pred_fallthru
    _
  // Predicated region
  $region34: #{bert_embedding_forward.17} parent=0 // pred_check
    _
  $region35: #{bert_embedding_forward.17} parent=0 // pred_check_branch
    %199 = sbr.rel (0) target = $region37
  $region36: #{bert_embedding_forward.17} parent=0 // pred_region
    _
  $region37: #{bert_embedding_forward.17} parent=0 // pred_fallthru
    _
  // Predicated region
  $region38: #{bert_embedding_forward.17} parent=0 // pred_check
    _
  $region39: #{bert_embedding_forward.17} parent=0 // pred_check_branch
    %201 = sbr.rel (0) target = $region41
  $region40: #{bert_embedding_forward.17} parent=0 // pred_region
    _
  $region41: #{bert_embedding_forward.17} parent=0 // pred_fallthru
    _

// kernel: bert_embedding_forward.23
$region0: #{bert_embedding_forward.23}
  #allocation0 [shape = 'u32[]', space=smem, size = 0x4, offset = 0x4, fixed_abs, tag = 'smem constant byte address 0x4 - core index']
  #allocation1 [shape = 'u32[144,128]{1,0:T(1,128)}', space=vmem, size = 0x12000, scoped, tag = 'internal scratch']
  %s0 = inlined_call_operand.vmem [shape: bf16[2,32], index: 0, kind: input, shape index: {}]
  %s1 = inlined_call_operand.vmem [shape: bf16[32,32], index: 1, kind: input, shape index: {}]
  %s2 = inlined_call_operand.vmem [shape: f32[1,32], index: 2, kind: input, shape index: {}]
  %s3 = inlined_call_operand.vmem [shape: bf16[32,32], index: 3, kind: input, shape index: {}]
  %s4 = inlined_call_operand.vmem [shape: f32[1,32], index: 4, kind: input, shape index: {}]
  %s5 = inlined_call_operand.vmem [shape: bf16[32,16], index: 5, kind: input, shape index: {}]
  %s6 = inlined_call_operand.vmem [shape: f32[1,16], index: 6, kind: input, shape index: {}]
  %s7 = inlined_call_operand.hbm [shape: f32[2,32], index: 7, kind: output, shape index: {0}]
  %s8 = inlined_call_operand.hbm [shape: f32[2,16], index: 8, kind: output, shape index: {1}]
  %9 = xla_tuple %s7, %s8
  %s10 = sld [smem:[#allocation0]]
  $region46: #{bert_embedding_forward.23} parent=0
    _
  %s12 = ssub.s32 1, %s10
  %s13 = scalar_select 0, %s12, %s10
  $region1: #{bert_embedding_forward.23} parent=0
    #allocation2 [shape = 'u8[1024]{0}', space=vmem, size = 0x400, scoped, tag = 'output window, operand 0, single buffered']
    #allocation3 [shape = 's32[1]{0}', space=sflag, size = 0x4, scoped, tag = 'scoped memory for bert_embedding_forward.23']
    #allocation4 [shape = 'u8[1024]{0}', space=vmem, size = 0x400, scoped, tag = 'output window, operand 1, single buffered']
    #allocation5 [shape = 's32[1]{0}', space=sflag, size = 0x4, scoped, tag = 'scoped memory for bert_embedding_forward.23']
    %14 = vsyncpa [#allocation3], 0
    %15 = vsyncpa [#allocation5], 0
    // Predicated region
    $region2: #{bert_embedding_forward.23} parent=1 // pred_check
      _
    $region3: #{bert_embedding_forward.23} parent=1 // pred_check_branch
      %17 = sbr.rel (0) target = $region5
    $region4: #{bert_embedding_forward.23} parent=1 // pred_region
      _
    $region5: #{bert_embedding_forward.23} parent=1 // pred_fallthru
      _
    // Predicated region
    $region6: #{bert_embedding_forward.23} parent=1 // pred_check
      _
    $region7: #{bert_embedding_forward.23} parent=1 // pred_check_branch
      %19 = sbr.rel (0) target = $region9
    $region8: #{bert_embedding_forward.23} parent=1 // pred_region
      _
    $region9: #{bert_embedding_forward.23} parent=1 // pred_fallthru
      _
    // Predicated region
    $region10: #{bert_embedding_forward.23} parent=1 // pred_check
      _
    $region11: #{bert_embedding_forward.23} parent=1 // pred_check_branch
      %21 = sbr.rel (0) target = $region13
    $region12: #{bert_embedding_forward.23} parent=1 // pred_region
      _
    $region13: #{bert_embedding_forward.23} parent=1 // pred_fallthru
      _
    // Predicated region
    $region14: #{bert_embedding_forward.23} parent=1 // pred_check
      _
    $region15: #{bert_embedding_forward.23} parent=1 // pred_check_branch
      %23 = sbr.rel (0) target = $region17
    $region16: #{bert_embedding_forward.23} parent=1 // pred_region
      _
    $region17: #{bert_embedding_forward.23} parent=1 // pred_fallthru
      _
    // Predicated region
    $region18: #{bert_embedding_forward.23} parent=1 // pred_check
      _
    $region19: #{bert_embedding_forward.23} parent=1 // pred_check_branch
      %25 = sbr.rel (0) target = $region21
    $region20: #{bert_embedding_forward.23} parent=1 // pred_region
      _
    $region21: #{bert_embedding_forward.23} parent=1 // pred_fallthru
      _
    // Predicated region
    $region22: #{bert_embedding_forward.23} parent=1 // pred_check
      _
    $region23: #{bert_embedding_forward.23} parent=1 // pred_check_branch
      %27 = sbr.rel (0) target = $region25
    $region24: #{bert_embedding_forward.23} parent=1 // pred_region
      _
    $region25: #{bert_embedding_forward.23} parent=1 // pred_fallthru
      _
    // Predicated region
    $region26: #{bert_embedding_forward.23} parent=1 // pred_check
      _
    $region27: #{bert_embedding_forward.23} parent=1 // pred_check_branch
      %29 = sbr.rel (0) target = $region29
    $region28: #{bert_embedding_forward.23} parent=1 // pred_region
      _
    $region29: #{bert_embedding_forward.23} parent=1 // pred_fallthru
      _
    %v31 = vld [vmem:[%s0] sm:$0x1]
    %v32 = vld [vmem:[%s1] sm:$0xf]
    %v33 = vld [vmem:[%s1 + $0x4] sm:$0xf]
    %v34 = vld [vmem:[%s1 + $0x8] sm:$0xf]
    %v35 = vld [vmem:[%s1 + $0xc] sm:$0xf]
    %v36 = vld [vmem:[%s2] sm:$0x1]
    %v38 = vlaneseq
    %v39 = vshrl.u32 %v38, 7
    %v40 = vsub.s32 0, %v39
    %v41 = vrot.slane %v36, %v40
    %v47 = vunpack.c.l.b16 %v32
    %v48 = vunpack.c.l.b16 %v33
    %v49 = vunpack.c.l.b16 %v34
    %v50 = vunpack.c.l.b16 %v35
    %v51 = vpack.c.b16 %v48, %v47
    %v52 = vpack.c.b16 %v50, %v49
    %vm55 = vcmask 261120
    %v57 = vsel %vm55, %v31, 0
    %59 = vmatprep.subr.bf16.mxu0 0
    %60 = vmatpush1.bf16.msra.mxu0 %v51
    %61 = vmatprep.subr.bf16.mxu0 0
    %62 = vmatpush1.bf16.msra.mxu0 %v52
    %63 = vmatprep.subr.bf16.mxu0 0
    %64 = vmatpush1.bf16.msra.mxu0 0
    %65 = vmatprep.subr.bf16.mxu0 0
    %66 = vmatpush1.bf16.msra.mxu0 0
    %67 = vmatprep.subr.bf16.mxu0 0
    %68 = vmatpush1.bf16.msra.mxu0 0
    %69 = vmatprep.subr.bf16.mxu0 0
    %70 = vmatpush1.bf16.msra.mxu0 0
    %71 = vmatprep.subr.bf16.mxu0 0
    %72 = vmatpush1.bf16.msra.mxu0 0
    %73 = vmatprep.subr.bf16.mxu0 0
    %74 = vmatpush1.bf16.msra.mxu0 0
    %75 = vmatprep.subr.bf16.mxu0 0
    %76 = vmatpush1.bf16.msra.mxu0 0
    %77 = vmatprep.subr.bf16.mxu0 0
    %78 = vmatpush1.bf16.msra.mxu0 0
    %79 = vmatprep.subr.bf16.mxu0 0
    %80 = vmatpush1.bf16.msra.mxu0 0
    %81 = vmatprep.subr.bf16.mxu0 0
    %82 = vmatpush1.bf16.msra.mxu0 0
    %83 = vmatprep.subr.bf16.mxu0 0
    %84 = vmatpush1.bf16.msra.mxu0 0
    %85 = vmatprep.subr.bf16.mxu0 0
    %86 = vmatpush1.bf16.msra.mxu0 0
    %87 = vmatprep.subr.bf16.mxu0 0
    %88 = vmatpush1.bf16.msra.mxu0 0
    %89 = vmatprep.subr.bf16.mxu0 0
    %90 = vmatpush1.bf16.msra.mxu0 0
    %91 = vmatprep.mubr.bf16.mxu0 0
    %92 = vmatmul.mubr.bf16.gmra.mrb[0].mxu0 %v57
    %v93 = vpop.f32.mrb[0].mxu0
    %v94 = vadd.f32 %v41, %v93
    %v95 = vpop.f32.mrb[0].mxu0
    %v96 = vpop.f32.mrb[0].mxu0
    %v97 = vpop.f32.mrb[0].mxu0
    %98 = vdwg.mxu0
    %v99 = vtanh.pop %v94
    %vm100 = vcmask 254976
    %101 = vst.msk [vmem:[#allocation2] sm:$0x3] %vm100, %v99
    %v102 = vpack.c.bf16 %v99, %v99
    %v103 = vld [vmem:[%s3] sm:$0xf]
    %v104 = vld [vmem:[%s3 + $0x4] sm:$0xf]
    %v105 = vld [vmem:[%s3 + $0x8] sm:$0xf]
    %v106 = vld [vmem:[%s3 + $0xc] sm:$0xf]
    %v107 = vld [vmem:[%s4] sm:$0x1]
    %v109 = vlaneseq
    %v110 = vshrl.u32 %v109, 7
    %v111 = vsub.s32 0, %v110
    %v112 = vrot.slane %v107, %v111
    %v118 = vunpack.c.l.b16 %v103
    %v119 = vunpack.c.l.b16 %v104
    %v120 = vunpack.c.l.b16 %v105
    %v121 = vunpack.c.l.b16 %v106
    %v122 = vpack.c.b16 %v119, %v118
    %v123 = vpack.c.b16 %v121, %v120
    %v127 = vsel %vm55, %v102, 0
    %129 = vmatprep.subr.bf16.mxu0 0
    %130 = vmatpush1.bf16.msra.mxu0 %v122
    %131 = vmatprep.subr.bf16.mxu0 0
    %132 = vmatpush1.bf16.msra.mxu0 %v123
    %133 = vmatprep.subr.bf16.mxu0 0
    %134 = vmatpush1.bf16.msra.mxu0 0
    %135 = vmatprep.subr.bf16.mxu0 0
    %136 = vmatpush1.bf16.msra.mxu0 0
    %137 = vmatprep.subr.bf16.mxu0 0
    %138 = vmatpush1.bf16.msra.mxu0 0
    %139 = vmatprep.subr.bf16.mxu0 0
    %140 = vmatpush1.bf16.msra.mxu0 0
    %141 = vmatprep.subr.bf16.mxu0 0
    %142 = vmatpush1.bf16.msra.mxu0 0
    %143 = vmatprep.subr.bf16.mxu0 0
    %144 = vmatpush1.bf16.msra.mxu0 0
    %145 = vmatprep.subr.bf16.mxu0 0
    %146 = vmatpush1.bf16.msra.mxu0 0
    %147 = vmatprep.subr.bf16.mxu0 0
    %148 = vmatpush1.bf16.msra.mxu0 0
    %149 = vmatprep.subr.bf16.mxu0 0
    %150 = vmatpush1.bf16.msra.mxu0 0
    %151 = vmatprep.subr.bf16.mxu0 0
    %152 = vmatpush1.bf16.msra.mxu0 0
    %153 = vmatprep.subr.bf16.mxu0 0
    %154 = vmatpush1.bf16.msra.mxu0 0
    %155 = vmatprep.subr.bf16.mxu0 0
    %156 = vmatpush1.bf16.msra.mxu0 0
    %157 = vmatprep.subr.bf16.mxu0 0
    %158 = vmatpush1.bf16.msra.mxu0 0
    %159 = vmatprep.subr.bf16.mxu0 0
    %160 = vmatpush1.bf16.msra.mxu0 0
    %161 = vmatprep.mubr.bf16.mxu0 0
    %162 = vmatmul.mubr.bf16.gmra.mrb[0].mxu0 %v127
    %v163 = vpop.f32.mrb[0].mxu0
    %v164 = vadd.f32 %v112, %v163
    %v165 = vpop.f32.mrb[0].mxu0
    %v166 = vpop.f32.mrb[0].mxu0
    %v167 = vpop.f32.mrb[0].mxu0
    %168 = vdwg.mxu0
    %v169 = vmax.f32 %v164, 0.0
    %v170 = vpack.c.bf16 %v169, %v169
    %v171 = vld [vmem:[%s5] sm:$0xf]
    %v172 = vld [vmem:[%s5 + $0x4] sm:$0xf]
    %v173 = vld [vmem:[%s5 + $0x8] sm:$0xf]
    %v174 = vld [vmem:[%s5 + $0xc] sm:$0xf]
    %v175 = vld [vmem:[%s6] sm:$0x1]
    %v177 = vlaneseq
    %v178 = vshrl.u32 %v177, 7
    %v179 = vsub.s32 0, %v178
    %v180 = vrot.slane %v175, %v179
    %v186 = vunpack.c.l.b16 %v171
    %v187 = vunpack.c.l.b16 %v172
    %v188 = vunpack.c.l.b16 %v173
    %v189 = vunpack.c.l.b16 %v174
    %v190 = vpack.c.b16 %v187, %v186
    %v191 = vpack.c.b16 %v189, %v188
    %v195 = vsel %vm55, %v170, 0
    %197 = vmatprep.subr.bf16.mxu0 0
    %198 = vmatpush1.bf16.msra.mxu0 %v190
    %199 = vmatprep.subr.bf16.mxu0 0
    %200 = vmatpush1.bf16.msra.mxu0 %v191
    %201 = vmatprep.subr.bf16.mxu0 0
    %202 = vmatpush1.bf16.msra.mxu0 0
    %203 = vmatprep.subr.bf16.mxu0 0
    %204 = vmatpush1.bf16.msra.mxu0 0
    %205 = vmatprep.subr.bf16.mxu0 0
    %206 = vmatpush1.bf16.msra.mxu0 0
    %207 = vmatprep.subr.bf16.mxu0 0
    %208 = vmatpush1.bf16.msra.mxu0 0
    %209 = vmatprep.subr.bf16.mxu0 0
    %210 = vmatpush1.bf16.msra.mxu0 0
    %211 = vmatprep.subr.bf16.mxu0 0
    %212 = vmatpush1.bf16.msra.mxu0 0
    %213 = vmatprep.subr.bf16.mxu0 0
    %214 = vmatpush1.bf16.msra.mxu0 0
    %215 = vmatprep.subr.bf16.mxu0 0
    %216 = vmatpush1.bf16.msra.mxu0 0
    %217 = vmatprep.subr.bf16.mxu0 0
    %218 = vmatpush1.bf16.msra.mxu0 0
    %219 = vmatprep.subr.bf16.mxu0 0
    %220 = vmatpush1.bf16.msra.mxu0 0
    %221 = vmatprep.subr.bf16.mxu0 0
    %222 = vmatpush1.bf16.msra.mxu0 0
    %223 = vmatprep.subr.bf16.mxu0 0
    %224 = vmatpush1.bf16.msra.mxu0 0
    %225 = vmatprep.subr.bf16.mxu0 0
    %226 = vmatpush1.bf16.msra.mxu0 0
    %227 = vmatprep.subr.bf16.mxu0 0
    %228 = vmatpush1.bf16.msra.mxu0 0
    %229 = vmatprep.mubr.bf16.mxu0 0
    %230 = vmatmul.mubr.bf16.gmra.mrb[0].mxu0 %v195
    %v231 = vpop.f32.mrb[0].mxu0
    %v232 = vadd.f32 %v180, %v231
    %v233 = vpop.f32.mrb[0].mxu0
    %v234 = vpop.f32.mrb[0].mxu0
    %v235 = vpop.f32.mrb[0].mxu0
    %236 = vdwg.mxu0
    %vm237 = vcmask 123904
    %238 = vst.msk [vmem:[#allocation4] sm:$0x3] %vm237, %v232
    // Predicated region
    $region30: #{bert_embedding_forward.23} parent=1 // pred_check
      _
    $region31: #{bert_embedding_forward.23} parent=1 // pred_check_branch
      %240 = sbr.rel (0) target = $region33
    $region32: #{bert_embedding_forward.23} parent=1 // pred_region
      %s242 = ssub.s32 32, 32
      %243 = vsyncadd [#allocation3], %s242
      %s245 = sshll.u32 [#allocation2], 4
      %s246 = int_to_ptr.vmem [resolvable:$true] %s245
      %248 = dma.vmem_to_hbm [thread:$0]  %s246, 32, %s7, [#allocation3]
    $region33: #{bert_embedding_forward.23} parent=1 // pred_fallthru
      _
    // Predicated region
    $region34: #{bert_embedding_forward.23} parent=1 // pred_check
      _
    $region35: #{bert_embedding_forward.23} parent=1 // pred_check_branch
      %250 = sbr.rel (0) target = $region37
    $region36: #{bert_embedding_forward.23} parent=1 // pred_region
      %s252 = ssub.s32 32, 32
      %253 = vsyncadd [#allocation5], %s252
      %s255 = sshll.u32 [#allocation4], 4
      %s256 = int_to_ptr.vmem [resolvable:$true] %s255
      %258 = dma.vmem_to_hbm [thread:$0]  %s256, 32, %s8, [#allocation5]
    $region37: #{bert_embedding_forward.23} parent=1 // pred_fallthru
      _
    // Predicated region
    $region38: #{bert_embedding_forward.23} parent=1 // pred_check
      _
    $region39: #{bert_embedding_forward.23} parent=1 // pred_check_branch
      %260 = sbr.rel (0) target = $region41
    $region40: #{bert_embedding_forward.23} parent=1 // pred_region
      %261 = dma.done [#allocation3], 32
    $region41: #{bert_embedding_forward.23} parent=1 // pred_fallthru
      _
    // Predicated region
    $region42: #{bert_embedding_forward.23} parent=1 // pred_check
      _
    $region43: #{bert_embedding_forward.23} parent=1 // pred_check_branch
      %263 = sbr.rel (0) target = $region45
    $region44: #{bert_embedding_forward.23} parent=1 // pred_region
      %264 = dma.done [#allocation5], 32
    $region45: #{bert_embedding_forward.23} parent=1 // pred_fallthru
      _
    %265 = vsyncpa [#allocation3], 1
    %266 = vsyncpa [#allocation5], 1

</llo_original>
